<compile_context>
chip_gen: v5e
topology: v5e:2x2
jax: 0.10.0
libtpu: 0.0.40
codegen_flags: <defaults>
</compile_context>

<pallas_src>
import functools
import math

import jax
import jax.numpy as jnp
from jax import lax
from jax.experimental import pallas as pl
from jax.experimental.pallas import tpu as pltpu


def _round_up(x, m):
    return (x + m - 1) // m * m


def _sigmoid(x):
    # Exact f32 formula (kept divide-based so the f32 path matches the reference
    # to ~1e-7; the EUP approx-reciprocal variant would need a looser tolerance).
    return 1.0 / (1.0 + jnp.exp(-x))


def _gru_fc_kernel(x_ref, wih_ref, whh_ref, wfc_ref, bih_ref, bhn_ref, bfc_ref,
                   o_ref, h_carry, ih_scr, hs_scr, *, TC, NP, HP):
    """One time-chunk of the GRU + FC.  All shapes padded/aligned host-side.

    Refs:
      x_ref   (TC*NP, IP)  chunk of input rows, (time, batch) flattened, matmul dtype
      wih_ref (IP, 3*HP)   W_ih^T, gate blocks 128-lane aligned, matmul dtype
      whh_ref (HP, 3*HP)   W_hh^T, f32 (serial recurrence kept in f32)
      wfc_ref (HP, OP)     W_fc^T, matmul dtype
      bih_ref (1, 3*HP)    b_ih with b_hr / b_hz folded in (f32)
      bhn_ref (1, HP)      b_hn (kept separate: multiplied by r_t) (f32)
      bfc_ref (1, OP)      fc bias (f32)
      o_ref   (TC*NP, OP)  chunk of outputs
    Scratch:
      h_carry VMEM (NP, HP) f32          hidden state, persists across grid steps
      ih_scr  VMEM (TC*NP, 3*HP) f32     input projection for the chunk
      hs_scr  VMEM (TC*NP, HP) mm-dtype  hidden states of the chunk (FC input)
    """
    @pl.when(pl.program_id(0) == 0)
    def _():
        h_carry[...] = jnp.zeros_like(h_carry)

    # Input projection for every (t, n) row of the chunk in one MXU matmul.
    ih_scr[...] = (jnp.dot(x_ref[...], wih_ref[...],
                           preferred_element_type=jnp.float32)
                   + bih_ref[...])

    whh = whh_ref[...]                                   # loop-invariant (HP, 3HP)
    b_hn = jnp.broadcast_to(bhn_ref[...], (NP, HP))      # hoisted (no per-step bcast)

    def step(t, h):                                      # h: (NP, HP) f32
        row = pl.multiple_of(t * NP, NP)                 # NP % 8 == 0 -> sublane aligned
        gi = ih_scr[pl.ds(row, NP), :]                   # (NP, 3HP), 128-lane gate blocks
        # TODO(synk): pltpu.matmul_push_rhs(whh) once + matmul_acc_lhs per step.
        gh = jnp.dot(h, whh, preferred_element_type=jnp.float32)
        r = _sigmoid(gi[:, :HP] + gh[:, :HP])
        z = _sigmoid(gi[:, HP:2 * HP] + gh[:, HP:2 * HP])
        n = jnp.tanh(gi[:, 2 * HP:] + r * (gh[:, 2 * HP:] + b_hn))
        h_new = n + z * (h - n)                          # == (1-z)*n + z*h
        hs_scr[pl.ds(row, NP), :] = h_new.astype(hs_scr.dtype)
        return h_new

    h_carry[...] = lax.fori_loop(0, TC, step, h_carry[...], unroll=min(TC, 8))

    # FC over every hidden state of the chunk in one MXU matmul; lane-dense store.
    o_ref[...] = (jnp.dot(hs_scr[...], wfc_ref[...],
                          preferred_element_type=jnp.float32)
                  + bfc_ref[...]).astype(o_ref.dtype)


def generator_forward(x, params, *, time_chunk=32, matmul_dtype=jnp.bfloat16):
    """x: (T, N, input_size) -- PyTorch GRU layout (seq, batch, feature).

    Returns (T, N, output_size), matching Generator.forward(x).
    """
    T, N, I = x.shape
    H = params["w_hh"].shape[1]
    O = params["fc_w"].shape[0]

    # Hardware-aligned padded sizes.
    NP = _round_up(N, 8)        # sublane alignment for the per-step h stores
    HP = _round_up(H, 128)      # each gate block starts on a 128-lane boundary
    IP = _round_up(I, 128)      # lane-aligned input features / MXU depth
    OP = _round_up(O, 128)      # lane-dense (unmasked) output stores
    TC = max(1, min(time_chunk, T))
    Tp = _round_up(T, TC)
    n_chunks = Tp // TC
    rows = TC * NP

    # ---- host-side one-time data prep (zero padding keeps the math exact) ----
    x_pad = jnp.pad(x, ((0, Tp - T), (0, NP - N), (0, IP - I)))
    x2d = x_pad.reshape(Tp * NP, IP).astype(matmul_dtype)      # row-major reshape

    def _pad_gates_2d(w, rows_to, cols_to):
        # w: (3H, C) in PyTorch gate order r|z|n; zero-pad each gate block so
        # gate g starts at row g*rows_to of the result (-> 128-lane aligned after .T).
        gates = [w[g * H:(g + 1) * H] for g in range(3)]
        gates = [jnp.pad(g_, ((0, rows_to - H), (0, cols_to - g_.shape[1])))
                 for g_ in gates]
        return jnp.concatenate(gates, axis=0)                  # (3*rows_to, cols_to)

    def _pad_gates_1d(b, to):
        gates = [b[g * H:(g + 1) * H] for g in range(3)]
        return jnp.concatenate([jnp.pad(g_, (0, to - H)) for g_ in gates], axis=0)

    w_ihT = _pad_gates_2d(params["w_ih"], HP, IP).T.astype(matmul_dtype)   # (IP, 3HP)
    w_hhT = _pad_gates_2d(params["w_hh"], HP, HP).T.astype(jnp.float32)    # (HP, 3HP)
    w_fcT = jnp.pad(params["fc_w"],
                    ((0, OP - O), (0, HP - H))).T.astype(matmul_dtype)     # (HP, OP)

    b_ih_p = _pad_gates_1d(params["b_ih"].astype(jnp.float32), HP)         # (3HP,)
    b_hh_p = _pad_gates_1d(params["b_hh"].astype(jnp.float32), HP)         # (3HP,)
    # Fold b_hr / b_hz into the input-projection bias; b_hn stays separate (× r_t).
    bih = (b_ih_p + b_hh_p.at[2 * HP:].set(0.0)).reshape(1, 3 * HP)
    bhn = b_hh_p[2 * HP:].reshape(1, HP)
    bfc = jnp.pad(params["fc_b"].astype(jnp.float32), (0, OP - O)).reshape(1, OP)

    # ---- VMEM budget (double-buffered pipelined blocks + weights + scratch) ----
    def nbytes(shape, dt):
        return math.prod(shape) * jnp.dtype(dt).itemsize

    vmem = (2 * nbytes((rows, IP), matmul_dtype)          # x chunk (double buffered)
            + 2 * nbytes((rows, OP), x.dtype)             # out chunk
            + 2 * (nbytes((IP, 3 * HP), matmul_dtype)
                   + nbytes((HP, 3 * HP), jnp.float32)
                   + nbytes((HP, OP), matmul_dtype)
                   + nbytes((1, 3 * HP), jnp.float32)
                   + nbytes((1, HP), jnp.float32)
                   + nbytes((1, OP), jnp.float32))
            + nbytes((NP, HP), jnp.float32)               # persistent h carry
            + nbytes((rows, 3 * HP), jnp.float32)         # ih scratch
            + nbytes((rows, HP), matmul_dtype))           # hs scratch
    vmem_limit = min(int(vmem * 1.5) + (4 << 20), 128 << 20)

    kernel = functools.partial(_gru_fc_kernel, TC=TC, NP=NP, HP=HP)

    out2d = pl.pallas_call(
        kernel,
        out_shape=jax.ShapeDtypeStruct((Tp * NP, OP), x.dtype),
        grid_spec=pltpu.PrefetchScalarGridSpec(
            num_scalar_prefetch=0,
            grid=(n_chunks,),
            in_specs=[
                pl.BlockSpec((rows, IP), lambda c: (c, 0)),        # x, chunked in time
                pl.BlockSpec((IP, 3 * HP), lambda c: (0, 0)),      # W_ih^T
                pl.BlockSpec((HP, 3 * HP), lambda c: (0, 0)),      # W_hh^T
                pl.BlockSpec((HP, OP), lambda c: (0, 0)),          # W_fc^T
                pl.BlockSpec((1, 3 * HP), lambda c: (0, 0)),       # folded GRU bias
                pl.BlockSpec((1, HP), lambda c: (0, 0)),           # b_hn
                pl.BlockSpec((1, OP), lambda c: (0, 0)),           # fc bias
            ],
            out_specs=pl.BlockSpec((rows, OP), lambda c: (c, 0)),
            scratch_shapes=[
                pltpu.VMEM((NP, HP), jnp.float32),                 # h carry (persists)
                pltpu.VMEM((rows, 3 * HP), jnp.float32),           # input projection
                pltpu.VMEM((rows, HP), matmul_dtype),              # chunk hidden states
            ],
        ),
        compiler_params=pltpu.CompilerParams(
            # sequential: hidden state carried across chunks in scratch
            dimension_semantics=("arbitrary",),
            vmem_limit_bytes=vmem_limit),
    )(x2d, w_ihT, w_hhT, w_fcT, bih, bhn, bfc)

    # Strip padding (row-major reshape + cheap slice).
    return out2d.reshape(Tp, NP, OP)[:T, :N, :O]


def init_params(key, input_size, hidden_size, output_size):
    """Deterministic synthetic init matching nn.GRU / nn.Linear parameter shapes."""
    k1, k2, k3, k4, k5, k6 = jax.random.split(key, 6)
    kg = 1.0 / math.sqrt(hidden_size)   # PyTorch GRU default init range
    kf = 1.0 / math.sqrt(hidden_size)   # Linear(in=hidden) default init range
    return {
        "w_ih": jax.random.uniform(k1, (3 * hidden_size, input_size), jnp.float32, -kg, kg),
        "w_hh": jax.random.uniform(k2, (3 * hidden_size, hidden_size), jnp.float32, -kg, kg),
        "b_ih": jax.random.uniform(k3, (3 * hidden_size,), jnp.float32, -kg, kg),
        "b_hh": jax.random.uniform(k4, (3 * hidden_size,), jnp.float32, -kg, kg),
        "fc_w": jax.random.uniform(k5, (output_size, hidden_size), jnp.float32, -kf, kf),
        "fc_b": jax.random.uniform(k6, (output_size,), jnp.float32, -kf, kf),
    }


def _reference(x, params):
    """Pure-JAX f32 reference of Generator.forward (single-layer GRU + Linear),
    written in the straight PyTorch formulation (no bias folding / padding)."""
    T, N, I = x.shape
    H = params["w_hh"].shape[1]
    w_ihT = params["w_ih"].T
    w_hhT = params["w_hh"].T
    b_ih = params["b_ih"]
    b_hh = params["b_hh"]

    def step(h, x_t):
        gi = x_t @ w_ihT + b_ih
        gh = h @ w_hhT + b_hh
        r = _sigmoid(gi[:, :H] + gh[:, :H])
        z = _sigmoid(gi[:, H:2 * H] + gh[:, H:2 * H])
        n = jnp.tanh(gi[:, 2 * H:] + r * gh[:, 2 * H:])
        h_new = (1.0 - z) * n + z * h
        return h_new, h_new

    h0 = jnp.zeros((N, H), jnp.float32)
    _, hs = lax.scan(step, h0, x)                       # (T, N, H)
    return hs @ params["fc_w"].T + params["fc_b"]


if __name__ == "__main__":
    input_size, hidden_size, output_size = 32, 32, 32
    T, N = 8, 2   # seq len, batch

    root = jax.random.PRNGKey(0)
    kx, kp = jax.random.split(root)
    x = jax.random.normal(kx, (T, N, input_size), jnp.float32)
    params = init_params(kp, input_size, hidden_size, output_size)
    ref = _reference(x, params)

    # 1) Full-f32 path (exact check vs reference); time_chunk=4 -> 2 grid steps,
    #    exercising the cross-chunk hidden-state carry.
    out_f32 = generator_forward(x, params, time_chunk=4, matmul_dtype=jnp.float32)
    out_f32 = jax.block_until_ready(out_f32)
    assert out_f32.shape == (T, N, output_size)
    assert jnp.allclose(out_f32, ref, atol=1e-4, rtol=1e-4), "f32 mismatch vs reference"

    # 2) Default fast path: bf16 operands for the two big matmuls (f32 accumulate /
    #    f32 gate math) -> compare against the f32 reference with bf16-level tolerance.
    out_bf16 = generator_forward(x, params, time_chunk=4)
    out_bf16 = jax.block_until_ready(out_bf16)
    assert out_bf16.shape == (T, N, output_size)
    assert jnp.allclose(out_bf16, ref, atol=5e-2, rtol=5e-2), "bf16 mismatch vs reference"

    print("KERNEL_OK")
</pallas_src>

<mosaic_0001>
module attributes {stable_mosaic.version = 11 : i64} {
  func.func @_gru_fc_kernel(%arg0: i32, %arg1: memref<32x128xf32, #tpu.memory_space<vmem>>, %arg2: memref<128x384xf32, #tpu.memory_space<vmem>>, %arg3: memref<128x384xf32, #tpu.memory_space<vmem>>, %arg4: memref<128x128xf32, #tpu.memory_space<vmem>>, %arg5: memref<1x384xf32, #tpu.memory_space<vmem>>, %arg6: memref<1x128xf32, #tpu.memory_space<vmem>>, %arg7: memref<1x128xf32, #tpu.memory_space<vmem>>, %arg8: memref<32x128xf32, #tpu.memory_space<vmem>>, %arg9: memref<8x128xf32, #tpu.memory_space<vmem>>, %arg10: memref<32x384xf32, #tpu.memory_space<vmem>>, %arg11: memref<32x128xf32, #tpu.memory_space<vmem>>) attributes {dimension_semantics = [#tpu.dimension_semantics<arbitrary>], iteration_bounds = array<i64: 2>, scalar_prefetch = 0 : i64, scratch_operands = 3 : i64, tpu.core_type = #tpu.core_type<tc>, window_params = [{transform_indices = @transform_0, window_bounds = array<i64: 32, 128>}, {pipeline_mode = #tpu.pipeline_mode<synchronous>, transform_indices = @transform_1, window_bounds = array<i64: 128, 384>}, {pipeline_mode = #tpu.pipeline_mode<synchronous>, transform_indices = @transform_2, window_bounds = array<i64: 128, 384>}, {pipeline_mode = #tpu.pipeline_mode<synchronous>, transform_indices = @transform_3, window_bounds = array<i64: 128, 128>}, {pipeline_mode = #tpu.pipeline_mode<synchronous>, transform_indices = @transform_4, window_bounds = array<i64: 1, 384>}, {pipeline_mode = #tpu.pipeline_mode<synchronous>, transform_indices = @transform_5, window_bounds = array<i64: 1, 128>}, {pipeline_mode = #tpu.pipeline_mode<synchronous>, transform_indices = @transform_6, window_bounds = array<i64: 1, 128>}, {transform_indices = @transform_7, window_bounds = array<i64: 32, 128>}]} {
    %c0_i32 = arith.constant 0 : i32
    %0 = arith.cmpi eq, %arg0, %c0_i32 : i32
    %1 = arith.extui %0 : i1 to i32
    %c0_i32_0 = arith.constant 0 : i32
    %2 = arith.cmpi ne, %1, %c0_i32_0 : i32
    scf.if %2 {
      %cst_65 = arith.constant 0.000000e+00 : f32
      %167 = vector.broadcast %cst_65 : f32 to vector<8x128xf32>
      %c0_66 = arith.constant 0 : index
      %c0_67 = arith.constant 0 : index
      %168 = vector.load %arg9[%c0_66, %c0_67] : memref<8x128xf32, #tpu.memory_space<vmem>>, vector<8x128xf32>
      tpu.vector_store %arg9[%c0_66, %c0_67], %167 {strides = array<i32>} : memref<8x128xf32, #tpu.memory_space<vmem>>, vector<8x128xf32>,
    } else {
    }
    %c0 = arith.constant 0 : index
    %c0_1 = arith.constant 0 : index
    %3 = vector.load %arg1[%c0, %c0_1] : memref<32x128xf32, #tpu.memory_space<vmem>>, vector<32x128xf32>
    %c0_2 = arith.constant 0 : index
    %c0_3 = arith.constant 0 : index
    %4 = vector.load %arg2[%c0_2, %c0_3] : memref<128x384xf32, #tpu.memory_space<vmem>>, vector<128x384xf32>
    %cst = arith.constant dense<0.000000e+00> : vector<32x384xf32>
    %5 = tpu.matmul %3, %4, %cst {dimension_numbers = #tpu.dot_dimension_numbers<[1], [0], [0], [1], [0, 0, 1, 1], [], []>} : vector<32x128xf32>, vector<128x384xf32>, vector<32x384xf32> -> vector<32x384xf32>
    %c0_4 = arith.constant 0 : index
    %c0_5 = arith.constant 0 : index
    %6 = vector.load %arg5[%c0_4, %c0_5] : memref<1x384xf32, #tpu.memory_space<vmem>>, vector<1x384xf32>
    %7 = vector.broadcast %6 : vector<1x384xf32> to vector<32x384xf32>
    %8 = arith.addf %5, %7 : vector<32x384xf32>
    %c0_6 = arith.constant 0 : index
    %c0_7 = arith.constant 0 : index
    %9 = vector.load %arg10[%c0_6, %c0_7] : memref<32x384xf32, #tpu.memory_space<vmem>>, vector<32x384xf32>
    tpu.vector_store %arg10[%c0_6, %c0_7], %8 {strides = array<i32>} : memref<32x384xf32, #tpu.memory_space<vmem>>, vector<32x384xf32>,
    %c0_8 = arith.constant 0 : index
    %c0_9 = arith.constant 0 : index
    %10 = vector.load %arg3[%c0_8, %c0_9] : memref<128x384xf32, #tpu.memory_space<vmem>>, vector<128x384xf32>
    %c0_10 = arith.constant 0 : index
    %c0_11 = arith.constant 0 : index
    %11 = vector.load %arg6[%c0_10, %c0_11] : memref<1x128xf32, #tpu.memory_space<vmem>>, vector<1x128xf32>
    %12 = vector.shape_cast %11 : vector<1x128xf32> to vector<1x128xf32>
    %13 = vector.broadcast %12 : vector<1x128xf32> to vector<8x128xf32>
    %c0_12 = arith.constant 0 : index
    %c0_13 = arith.constant 0 : index
    %14 = vector.load %arg9[%c0_12, %c0_13] : memref<8x128xf32, #tpu.memory_space<vmem>>, vector<8x128xf32>
    %c0_i32_14 = arith.constant 0 : i32
    %c8_i32 = arith.constant 8 : i32
    %15 = arith.muli %c0_i32_14, %c8_i32 : i32
    %16 = tpu.assume_multiple %15, 8 : i32
    %17 = arith.index_cast %16 : i32 to index
    %c0_15 = arith.constant 0 : index
    %18 = vector.load %arg10[%17, %c0_15] : memref<32x384xf32, #tpu.memory_space<vmem>>, vector<8x384xf32>
    %cst_16 = arith.constant dense<0.000000e+00> : vector<8x384xf32>
    %19 = tpu.matmul %14, %10, %cst_16 {dimension_numbers = #tpu.dot_dimension_numbers<[1], [0], [0], [1], [0, 0, 1, 1], [], []>} : vector<8x128xf32>, vector<128x384xf32>, vector<8x384xf32> -> vector<8x384xf32>
    %20 = vector.extract_strided_slice %18 {offsets = [0, 0], sizes = [8, 128], strides = [1, 1]} : vector<8x384xf32> to vector<8x128xf32>
    %21 = vector.extract_strided_slice %19 {offsets = [0, 0], sizes = [8, 128], strides = [1, 1]} : vector<8x384xf32> to vector<8x128xf32>
    %22 = arith.addf %20, %21 : vector<8x128xf32>
    %cst_17 = arith.constant 0.000000e+00 : f32
    %23 = vector.broadcast %cst_17 : f32 to vector<8x128xf32>
    %24 = arith.subf %23, %22 : vector<8x128xf32>
    %25 = math.exp %24 : vector<8x128xf32>
    %cst_18 = arith.constant 1.000000e+00 : f32
    %26 = vector.broadcast %cst_18 : f32 to vector<8x128xf32>
    %27 = arith.addf %26, %25 : vector<8x128xf32>
    %cst_19 = arith.constant 1.000000e+00 : f32
    %28 = vector.broadcast %cst_19 : f32 to vector<8x128xf32>
    %29 = arith.divf %28, %27 : vector<8x128xf32>
    %30 = vector.extract_strided_slice %18 {offsets = [0, 128], sizes = [8, 128], strides = [1, 1]} : vector<8x384xf32> to vector<8x128xf32>
    %31 = vector.extract_strided_slice %19 {offsets = [0, 128], sizes = [8, 128], strides = [1, 1]} : vector<8x384xf32> to vector<8x128xf32>
    %32 = arith.addf %30, %31 : vector<8x128xf32>
    %cst_20 = arith.constant 0.000000e+00 : f32
    %33 = vector.broadcast %cst_20 : f32 to vector<8x128xf32>
    %34 = arith.subf %33, %32 : vector<8x128xf32>
    %35 = math.exp %34 : vector<8x128xf32>
    %cst_21 = arith.constant 1.000000e+00 : f32
    %36 = vector.broadcast %cst_21 : f32 to vector<8x128xf32>
    %37 = arith.addf %36, %35 : vector<8x128xf32>
    %cst_22 = arith.constant 1.000000e+00 : f32
    %38 = vector.broadcast %cst_22 : f32 to vector<8x128xf32>
    %39 = arith.divf %38, %37 : vector<8x128xf32>
    %40 = vector.extract_strided_slice %18 {offsets = [0, 256], sizes = [8, 128], strides = [1, 1]} : vector<8x384xf32> to vector<8x128xf32>
    %41 = vector.extract_strided_slice %19 {offsets = [0, 256], sizes = [8, 128], strides = [1, 1]} : vector<8x384xf32> to vector<8x128xf32>
    %42 = arith.addf %41, %13 : vector<8x128xf32>
    %43 = arith.mulf %29, %42 : vector<8x128xf32>
    %44 = arith.addf %40, %43 : vector<8x128xf32>
    %45 = math.tanh %44 : vector<8x128xf32>
    %46 = arith.subf %14, %45 : vector<8x128xf32>
    %47 = arith.mulf %39, %46 : vector<8x128xf32>
    %48 = arith.addf %45, %47 : vector<8x128xf32>
    %49 = arith.index_cast %16 : i32 to index
    %c0_23 = arith.constant 0 : index
    %50 = vector.load %arg11[%49, %c0_23] : memref<32x128xf32, #tpu.memory_space<vmem>>, vector<8x128xf32>
    tpu.vector_store %arg11[%49, %c0_23], %48 {strides = array<i32>} : memref<32x128xf32, #tpu.memory_space<vmem>>, vector<8x128xf32>,
    %c1_i32 = arith.constant 1 : i32
    %c8_i32_24 = arith.constant 8 : i32
    %51 = arith.muli %c1_i32, %c8_i32_24 : i32
    %52 = tpu.assume_multiple %51, 8 : i32
    %53 = arith.index_cast %52 : i32 to index
    %c0_25 = arith.constant 0 : index
    %54 = vector.load %arg10[%53, %c0_25] : memref<32x384xf32, #tpu.memory_space<vmem>>, vector<8x384xf32>
    %cst_26 = arith.constant dense<0.000000e+00> : vector<8x384xf32>
    %55 = tpu.matmul %48, %10, %cst_26 {dimension_numbers = #tpu.dot_dimension_numbers<[1], [0], [0], [1], [0, 0, 1, 1], [], []>} : vector<8x128xf32>, vector<128x384xf32>, vector<8x384xf32> -> vector<8x384xf32>
    %56 = vector.extract_strided_slice %54 {offsets = [0, 0], sizes = [8, 128], strides = [1, 1]} : vector<8x384xf32> to vector<8x128xf32>
    %57 = vector.extract_strided_slice %55 {offsets = [0, 0], sizes = [8, 128], strides = [1, 1]} : vector<8x384xf32> to vector<8x128xf32>
    %58 = arith.addf %56, %57 : vector<8x128xf32>
    %cst_27 = arith.constant 0.000000e+00 : f32
    %59 = vector.broadcast %cst_27 : f32 to vector<8x128xf32>
    %60 = arith.subf %59, %58 : vector<8x128xf32>
    %61 = math.exp %60 : vector<8x128xf32>
    %cst_28 = arith.constant 1.000000e+00 : f32
    %62 = vector.broadcast %cst_28 : f32 to vector<8x128xf32>
    %63 = arith.addf %62, %61 : vector<8x128xf32>
    %cst_29 = arith.constant 1.000000e+00 : f32
    %64 = vector.broadcast %cst_29 : f32 to vector<8x128xf32>
    %65 = arith.divf %64, %63 : vector<8x128xf32>
    %66 = vector.extract_strided_slice %54 {offsets = [0, 128], sizes = [8, 128], strides = [1, 1]} : vector<8x384xf32> to vector<8x128xf32>
    %67 = vector.extract_strided_slice %55 {offsets = [0, 128], sizes = [8, 128], strides = [1, 1]} : vector<8x384xf32> to vector<8x128xf32>
    %68 = arith.addf %66, %67 : vector<8x128xf32>
    %cst_30 = arith.constant 0.000000e+00 : f32
    %69 = vector.broadcast %cst_30 : f32 to vector<8x128xf32>
    %70 = arith.subf %69, %68 : vector<8x128xf32>
    %71 = math.exp %70 : vector<8x128xf32>
    %cst_31 = arith.constant 1.000000e+00 : f32
    %72 = vector.broadcast %cst_31 : f32 to vector<8x128xf32>
    %73 = arith.addf %72, %71 : vector<8x128xf32>
    %cst_32 = arith.constant 1.000000e+00 : f32
    %74 = vector.broadcast %cst_32 : f32 to vector<8x128xf32>
    %75 = arith.divf %74, %73 : vector<8x128xf32>
    %76 = vector.extract_strided_slice %54 {offsets = [0, 256], sizes = [8, 128], strides = [1, 1]} : vector<8x384xf32> to vector<8x128xf32>
    %77 = vector.extract_strided_slice %55 {offsets = [0, 256], sizes = [8, 128], strides = [1, 1]} : vector<8x384xf32> to vector<8x128xf32>
    %78 = arith.addf %77, %13 : vector<8x128xf32>
    %79 = arith.mulf %65, %78 : vector<8x128xf32>
    %80 = arith.addf %76, %79 : vector<8x128xf32>
    %81 = math.tanh %80 : vector<8x128xf32>
    %82 = arith.subf %48, %81 : vector<8x128xf32>
    %83 = arith.mulf %75, %82 : vector<8x128xf32>
    %84 = arith.addf %81, %83 : vector<8x128xf32>
    %85 = arith.index_cast %52 : i32 to index
    %c0_33 = arith.constant 0 : index
    %86 = vector.load %arg11[%85, %c0_33] : memref<32x128xf32, #tpu.memory_space<vmem>>, vector<8x128xf32>
    tpu.vector_store %arg11[%85, %c0_33], %84 {strides = array<i32>} : memref<32x128xf32, #tpu.memory_space<vmem>>, vector<8x128xf32>,
    %c2_i32 = arith.constant 2 : i32
    %c8_i32_34 = arith.constant 8 : i32
    %87 = arith.muli %c2_i32, %c8_i32_34 : i32
    %88 = tpu.assume_multiple %87, 8 : i32
    %89 = arith.index_cast %88 : i32 to index
    %c0_35 = arith.constant 0 : index
    %90 = vector.load %arg10[%89, %c0_35] : memref<32x384xf32, #tpu.memory_space<vmem>>, vector<8x384xf32>
    %cst_36 = arith.constant dense<0.000000e+00> : vector<8x384xf32>
    %91 = tpu.matmul %84, %10, %cst_36 {dimension_numbers = #tpu.dot_dimension_numbers<[1], [0], [0], [1], [0, 0, 1, 1], [], []>} : vector<8x128xf32>, vector<128x384xf32>, vector<8x384xf32> -> vector<8x384xf32>
    %92 = vector.extract_strided_slice %90 {offsets = [0, 0], sizes = [8, 128], strides = [1, 1]} : vector<8x384xf32> to vector<8x128xf32>
    %93 = vector.extract_strided_slice %91 {offsets = [0, 0], sizes = [8, 128], strides = [1, 1]} : vector<8x384xf32> to vector<8x128xf32>
    %94 = arith.addf %92, %93 : vector<8x128xf32>
    %cst_37 = arith.constant 0.000000e+00 : f32
    %95 = vector.broadcast %cst_37 : f32 to vector<8x128xf32>
    %96 = arith.subf %95, %94 : vector<8x128xf32>
    %97 = math.exp %96 : vector<8x128xf32>
    %cst_38 = arith.constant 1.000000e+00 : f32
    %98 = vector.broadcast %cst_38 : f32 to vector<8x128xf32>
    %99 = arith.addf %98, %97 : vector<8x128xf32>
    %cst_39 = arith.constant 1.000000e+00 : f32
    %100 = vector.broadcast %cst_39 : f32 to vector<8x128xf32>
    %101 = arith.divf %100, %99 : vector<8x128xf32>
    %102 = vector.extract_strided_slice %90 {offsets = [0, 128], sizes = [8, 128], strides = [1, 1]} : vector<8x384xf32> to vector<8x128xf32>
    %103 = vector.extract_strided_slice %91 {offsets = [0, 128], sizes = [8, 128], strides = [1, 1]} : vector<8x384xf32> to vector<8x128xf32>
    %104 = arith.addf %102, %103 : vector<8x128xf32>
    %cst_40 = arith.constant 0.000000e+00 : f32
    %105 = vector.broadcast %cst_40 : f32 to vector<8x128xf32>
    %106 = arith.subf %105, %104 : vector<8x128xf32>
    %107 = math.exp %106 : vector<8x128xf32>
    %cst_41 = arith.constant 1.000000e+00 : f32
    %108 = vector.broadcast %cst_41 : f32 to vector<8x128xf32>
    %109 = arith.addf %108, %107 : vector<8x128xf32>
    %cst_42 = arith.constant 1.000000e+00 : f32
    %110 = vector.broadcast %cst_42 : f32 to vector<8x128xf32>
    %111 = arith.divf %110, %109 : vector<8x128xf32>
    %112 = vector.extract_strided_slice %90 {offsets = [0, 256], sizes = [8, 128], strides = [1, 1]} : vector<8x384xf32> to vector<8x128xf32>
    %113 = vector.extract_strided_slice %91 {offsets = [0, 256], sizes = [8, 128], strides = [1, 1]} : vector<8x384xf32> to vector<8x128xf32>
    %114 = arith.addf %113, %13 : vector<8x128xf32>
    %115 = arith.mulf %101, %114 : vector<8x128xf32>
    %116 = arith.addf %112, %115 : vector<8x128xf32>
    %117 = math.tanh %116 : vector<8x128xf32>
    %118 = arith.subf %84, %117 : vector<8x128xf32>
    %119 = arith.mulf %111, %118 : vector<8x128xf32>
    %120 = arith.addf %117, %119 : vector<8x128xf32>
    %121 = arith.index_cast %88 : i32 to index
    %c0_43 = arith.constant 0 : index
    %122 = vector.load %arg11[%121, %c0_43] : memref<32x128xf32, #tpu.memory_space<vmem>>, vector<8x128xf32>
    tpu.vector_store %arg11[%121, %c0_43], %120 {strides = array<i32>} : memref<32x128xf32, #tpu.memory_space<vmem>>, vector<8x128xf32>,
    %c3_i32 = arith.constant 3 : i32
    %c8_i32_44 = arith.constant 8 : i32
    %123 = arith.muli %c3_i32, %c8_i32_44 : i32
    %124 = tpu.assume_multiple %123, 8 : i32
    %125 = arith.index_cast %124 : i32 to index
    %c0_45 = arith.constant 0 : index
    %126 = vector.load %arg10[%125, %c0_45] : memref<32x384xf32, #tpu.memory_space<vmem>>, vector<8x384xf32>
    %cst_46 = arith.constant dense<0.000000e+00> : vector<8x384xf32>
    %127 = tpu.matmul %120, %10, %cst_46 {dimension_numbers = #tpu.dot_dimension_numbers<[1], [0], [0], [1], [0, 0, 1, 1], [], []>} : vector<8x128xf32>, vector<128x384xf32>, vector<8x384xf32> -> vector<8x384xf32>
    %128 = vector.extract_strided_slice %126 {offsets = [0, 0], sizes = [8, 128], strides = [1, 1]} : vector<8x384xf32> to vector<8x128xf32>
    %129 = vector.extract_strided_slice %127 {offsets = [0, 0], sizes = [8, 128], strides = [1, 1]} : vector<8x384xf32> to vector<8x128xf32>
    %130 = arith.addf %128, %129 : vector<8x128xf32>
    %cst_47 = arith.constant 0.000000e+00 : f32
    %131 = vector.broadcast %cst_47 : f32 to vector<8x128xf32>
    %132 = arith.subf %131, %130 : vector<8x128xf32>
    %133 = math.exp %132 : vector<8x128xf32>
    %cst_48 = arith.constant 1.000000e+00 : f32
    %134 = vector.broadcast %cst_48 : f32 to vector<8x128xf32>
    %135 = arith.addf %134, %133 : vector<8x128xf32>
    %cst_49 = arith.constant 1.000000e+00 : f32
    %136 = vector.broadcast %cst_49 : f32 to vector<8x128xf32>
    %137 = arith.divf %136, %135 : vector<8x128xf32>
    %138 = vector.extract_strided_slice %126 {offsets = [0, 128], sizes = [8, 128], strides = [1, 1]} : vector<8x384xf32> to vector<8x128xf32>
    %139 = vector.extract_strided_slice %127 {offsets = [0, 128], sizes = [8, 128], strides = [1, 1]} : vector<8x384xf32> to vector<8x128xf32>
    %140 = arith.addf %138, %139 : vector<8x128xf32>
    %cst_50 = arith.constant 0.000000e+00 : f32
    %141 = vector.broadcast %cst_50 : f32 to vector<8x128xf32>
    %142 = arith.subf %141, %140 : vector<8x128xf32>
    %143 = math.exp %142 : vector<8x128xf32>
    %cst_51 = arith.constant 1.000000e+00 : f32
    %144 = vector.broadcast %cst_51 : f32 to vector<8x128xf32>
    %145 = arith.addf %144, %143 : vector<8x128xf32>
    %cst_52 = arith.constant 1.000000e+00 : f32
    %146 = vector.broadcast %cst_52 : f32 to vector<8x128xf32>
    %147 = arith.divf %146, %145 : vector<8x128xf32>
    %148 = vector.extract_strided_slice %126 {offsets = [0, 256], sizes = [8, 128], strides = [1, 1]} : vector<8x384xf32> to vector<8x128xf32>
    %149 = vector.extract_strided_slice %127 {offsets = [0, 256], sizes = [8, 128], strides = [1, 1]} : vector<8x384xf32> to vector<8x128xf32>
    %150 = arith.addf %149, %13 : vector<8x128xf32>
    %151 = arith.mulf %137, %150 : vector<8x128xf32>
    %152 = arith.addf %148, %151 : vector<8x128xf32>
    %153 = math.tanh %152 : vector<8x128xf32>
    %154 = arith.subf %120, %153 : vector<8x128xf32>
    %155 = arith.mulf %147, %154 : vector<8x128xf32>
    %156 = arith.addf %153, %155 : vector<8x128xf32>
    %157 = arith.index_cast %124 : i32 to index
    %c0_53 = arith.constant 0 : index
    %158 = vector.load %arg11[%157, %c0_53] : memref<32x128xf32, #tpu.memory_space<vmem>>, vector<8x128xf32>
    tpu.vector_store %arg11[%157, %c0_53], %156 {strides = array<i32>} : memref<32x128xf32, #tpu.memory_space<vmem>>, vector<8x128xf32>,
    %c4_i32 = arith.constant 4 : i32
    %c0_54 = arith.constant 0 : index
    %c0_55 = arith.constant 0 : index
    %159 = vector.load %arg9[%c0_54, %c0_55] : memref<8x128xf32, #tpu.memory_space<vmem>>, vector<8x128xf32>
    tpu.vector_store %arg9[%c0_54, %c0_55], %156 {strides = array<i32>} : memref<8x128xf32, #tpu.memory_space<vmem>>, vector<8x128xf32>,
    %c0_56 = arith.constant 0 : index
    %c0_57 = arith.constant 0 : index
    %160 = vector.load %arg11[%c0_56, %c0_57] : memref<32x128xf32, #tpu.memory_space<vmem>>, vector<32x128xf32>
    %c0_58 = arith.constant 0 : index
    %c0_59 = arith.constant 0 : index
    %161 = vector.load %arg4[%c0_58, %c0_59] : memref<128x128xf32, #tpu.memory_space<vmem>>, vector<128x128xf32>
    %cst_60 = arith.constant dense<0.000000e+00> : vector<32x128xf32>
    %162 = tpu.matmul %160, %161, %cst_60 {dimension_numbers = #tpu.dot_dimension_numbers<[1], [0], [0], [1], [0, 0, 1, 1], [], []>} : vector<32x128xf32>, vector<128x128xf32>, vector<32x128xf32> -> vector<32x128xf32>
    %c0_61 = arith.constant 0 : index
    %c0_62 = arith.constant 0 : index
    %163 = vector.load %arg7[%c0_61, %c0_62] : memref<1x128xf32, #tpu.memory_space<vmem>>, vector<1x128xf32>
    %164 = vector.broadcast %163 : vector<1x128xf32> to vector<32x128xf32>
    %165 = arith.addf %162, %164 : vector<32x128xf32>
    %c0_63 = arith.constant 0 : index
    %c0_64 = arith.constant 0 : index
    %166 = vector.load %arg8[%c0_63, %c0_64] : memref<32x128xf32, #tpu.memory_space<vmem>>, vector<32x128xf32>
    tpu.vector_store %arg8[%c0_63, %c0_64], %165 {strides = array<i32>} : memref<32x128xf32, #tpu.memory_space<vmem>>, vector<32x128xf32>,
    return
  }
  func.func @transform_0(%arg0: i32) -> (i32, i32) {
    %c0_i32 = arith.constant 0 : i32
    %c0_i32_0 = arith.constant 0 : i32
    return %arg0, %c0_i32 : i32, i32
  }
  func.func @transform_1(%arg0: i32) -> (i32, i32) {
    %c0_i32 = arith.constant 0 : i32
    %c0_i32_0 = arith.constant 0 : i32
    %c0_i32_1 = arith.constant 0 : i32
    return %c0_i32, %c0_i32_0 : i32, i32
  }
  func.func @transform_2(%arg0: i32) -> (i32, i32) {
    %c0_i32 = arith.constant 0 : i32
    %c0_i32_0 = arith.constant 0 : i32
    %c0_i32_1 = arith.constant 0 : i32
    return %c0_i32, %c0_i32_0 : i32, i32
  }
  func.func @transform_3(%arg0: i32) -> (i32, i32) {
    %c0_i32 = arith.constant 0 : i32
    %c0_i32_0 = arith.constant 0 : i32
    %c0_i32_1 = arith.constant 0 : i32
    return %c0_i32, %c0_i32_0 : i32, i32
  }
  func.func @transform_4(%arg0: i32) -> (i32, i32) {
    %c0_i32 = arith.constant 0 : i32
    %c0_i32_0 = arith.constant 0 : i32
    %c0_i32_1 = arith.constant 0 : i32
    return %c0_i32, %c0_i32_0 : i32, i32
  }
  func.func @transform_5(%arg0: i32) -> (i32, i32) {
    %c0_i32 = arith.constant 0 : i32
    %c0_i32_0 = arith.constant 0 : i32
    %c0_i32_1 = arith.constant 0 : i32
    return %c0_i32, %c0_i32_0 : i32, i32
  }
  func.func @transform_6(%arg0: i32) -> (i32, i32) {
    %c0_i32 = arith.constant 0 : i32
    %c0_i32_0 = arith.constant 0 : i32
    %c0_i32_1 = arith.constant 0 : i32
    return %c0_i32, %c0_i32_0 : i32, i32
  }
  func.func @transform_7(%arg0: i32) -> (i32, i32) {
    %c0_i32 = arith.constant 0 : i32
    %c0_i32_0 = arith.constant 0 : i32
    return %arg0, %c0_i32 : i32, i32
  }
}

</mosaic_0001>

<llo_original>
// kernel: tpu_custom_call.1
$region0: #{tpu_custom_call.1}
  #allocation0 [shape = 'u32[]', space=smem, size = 0x4, offset = 0x4, fixed_abs, tag = 'smem constant byte address 0x4 - core index']
  #allocation1 [shape = 'u32[72,128]{1,0:T(1,128)}', space=vmem, size = 0x9000, scoped, tag = 'internal scratch']
  #allocation2 [shape = 'f32[8,128]{1,0:T(8,128)}', space=vmem, size = 0x1000, scoped, tag = 'scratch operand']
  #allocation3 [shape = 'f32[32,384]{1,0:T(8,128)}', space=vmem, size = 0xc000, scoped, tag = 'scratch operand']
  #allocation4 [shape = 'f32[32,128]{1,0:T(8,128)}', space=vmem, size = 0x4000, scoped, tag = 'scratch operand']
  %s0 = inlined_call_operand.hbm [shape: f32[64,128], index: 0, kind: input, shape index: {}]
  %s1 = inlined_call_operand.hbm [shape: f32[128,384], index: 1, kind: input, shape index: {}]
  %s2 = inlined_call_operand.hbm [shape: f32[128,384], index: 2, kind: input, shape index: {}]
  %s3 = inlined_call_operand.hbm [shape: f32[128,128], index: 3, kind: input, shape index: {}]
  %s4 = inlined_call_operand.vmem [shape: f32[1,384], index: 4, kind: input, shape index: {}]
  %s5 = inlined_call_operand.vmem [shape: f32[1,128], index: 5, kind: input, shape index: {}]
  %s6 = inlined_call_operand.vmem [shape: f32[1,128], index: 6, kind: input, shape index: {}]
  %s7 = inlined_call_operand.hbm [shape: f32[64,128], index: 7, kind: output, shape index: {}]
  %s8 = sld [smem:[#allocation0]]
  $region81: #{tpu_custom_call.1} parent=0
    _
  %s10 = ssub.s32 1, %s8
  %s11 = scalar_select 0, %s10, %s8
  $region1: #{tpu_custom_call.1} parent=0
    #allocation5 [shape = 'u8[32768]{0}', space=vmem, size = 0x8000, scoped, tag = 'input window, operand 0']
    #allocation6 [shape = 's32[2]{0}', space=sflag, size = 0x8, scoped, tag = 'scoped memory for tpu_custom_call.1']
    #allocation7 [shape = 's32[2]{0}', space=sflag, size = 0x8, scoped, tag = 'scoped memory for tpu_custom_call.1']
    #allocation8 [shape = 'u8[196608]{0}', space=vmem, size = 0x30000, scoped, tag = 'input window, operand 1, single buffered']
    #allocation9 [shape = 's32[1]{0}', space=sflag, size = 0x4, scoped, tag = 'scoped memory for tpu_custom_call.1']
    #allocation10 [shape = 'u8[196608]{0}', space=vmem, size = 0x30000, scoped, tag = 'input window, operand 2, single buffered']
    #allocation11 [shape = 'u8[65536]{0}', space=vmem, size = 0x10000, scoped, tag = 'input window, operand 3, single buffered']
    #allocation12 [shape = 's32[1]{0}', space=sflag, size = 0x4, scoped, tag = 'scoped memory for tpu_custom_call.1']
    #allocation13 [shape = 'u8[32768]{0}', space=vmem, size = 0x8000, scoped, tag = 'output window, operand 0']
    %12 = vsyncpa [#allocation6], 0
    %s13 = scalar_lea.sflag [#allocation6], 1
    %14 = vsyncpa %s13, 0
    %15 = vsyncpa [#allocation9], 0
    %16 = vsyncpa [#allocation12], 0
    %17 = vsyncpa [#allocation7], 0
    %s18 = scalar_lea.sflag [#allocation7], 1
    %19 = vsyncpa %s18, 0
    loop: start=0, step=1, limit=4
    $region2: #{tpu_custom_call.1} parent=1 // loop_pre_header
      _
    $region3: #{tpu_custom_call.1} parent=1 // loop_header
      %s21 = sphi 0, %s25
      %p22 = scmp.ge.s32.totalorder %s21, 4
      %s31 = sphi 0, %s33
      %s34 = sphi 0, %s31
      %s35 = sphi 0, %s34
      %s51 = sphi 0, %s35
      %s55 = sphi 0, %s55
      %s57 = sphi 0, %s55
      %s58 = sphi 0, %s57
      %s72 = sphi 0, %s58
      %s76 = sphi 0, %s76
      %s78 = sphi 0, %s76
      %s79 = sphi 0, %s78
      %s93 = sphi 0, %s79
      %s97 = sphi 0, %s97
      %s99 = sphi 0, %s97
      %s100 = sphi 0, %s99
      %s114 = sphi 0, %s100
      %s118 = sphi 0, %s118
      %s120 = sphi 0, %s118
      %s121 = sphi 0, %s120
      %s135 = sphi 0, %s121
      %s139 = sphi 0, %s139
      %s141 = sphi 0, %s139
      %s142 = sphi 0, %s141
      %s156 = sphi 0, %s142
      %s160 = sphi 0, %s160
      %s162 = sphi 0, %s160
      %s163 = sphi 0, %s162
      %s177 = sphi 0, %s163
      %s183 = sphi 0, %s185
      %s186 = sphi 0, %s183
      %s187 = sphi 0, %s186
      %s203 = sphi 0, %s187
    $region4: #{tpu_custom_call.1} parent=1 // loop_header_branch
      %24 = sbr.rel (%p22) target = $region8
    $region5: #{tpu_custom_call.1} parent=1 // loop_body
      %s26 = ssub.s32 %s21, 1
      %s27 = ssub.s32 %s21, 2
      %s28 = sadd.s32 %s21, 1
      %s29 = ssub.s32 %s21, %s28
      %p30 = scmp.eq.s32.totalorder %s29, 0
      %s32 = sadd.s32 %s31, 1
      %s33 = scalar_select %p30, %s31, %s32
      %p36 = pneg %p30
      %p37 = scmp.eq.s32.totalorder %s21, 1
      %p38 = por %p36, %p37
      %p39 = scmp.ne.s32.totalorder %s31, %s34
      %p40 = scmp.eq.s32.totalorder %s21, 0
      %p41 = por %p39, %p40
      %p42 = scmp.ne.s32.totalorder %s31, %s34
      %p43 = scmp.eq.s32.totalorder %s26, 1
      %p44 = por %p42, %p43
      %p45 = scmp.ne.s32.totalorder %s34, %s35
      %p46 = scmp.eq.s32.totalorder %s26, 0
      %p47 = por %p45, %p46
      %p48 = scmp.ne.s32.totalorder %s34, %s35
      %p49 = scmp.eq.s32.totalorder %s27, 1
      %p50 = por %p48, %p49
      %p52 = scmp.ne.s32.totalorder %s35, %s51
      %p53 = scmp.eq.s32.totalorder %s27, 0
      %p54 = por %p52, %p53
      %s56 = sadd.s32 %s55, 1
      %p59 = scmp.eq.s32.totalorder %s21, 1
      %p60 = scmp.ne.s32.totalorder %s55, %s57
      %p61 = scmp.eq.s32.totalorder %s21, 0
      %p62 = por %p60, %p61
      %p63 = scmp.ne.s32.totalorder %s55, %s57
      %p64 = scmp.eq.s32.totalorder %s26, 1
      %p65 = por %p63, %p64
      %p66 = scmp.ne.s32.totalorder %s57, %s58
      %p67 = scmp.eq.s32.totalorder %s26, 0
      %p68 = por %p66, %p67
      %p69 = scmp.ne.s32.totalorder %s57, %s58
      %p70 = scmp.eq.s32.totalorder %s27, 1
      %p71 = por %p69, %p70
      %p73 = scmp.ne.s32.totalorder %s58, %s72
      %p74 = scmp.eq.s32.totalorder %s27, 0
      %p75 = por %p73, %p74
      %s77 = sadd.s32 %s76, 1
      %p80 = scmp.eq.s32.totalorder %s21, 1
      %p81 = scmp.ne.s32.totalorder %s76, %s78
      %p82 = scmp.eq.s32.totalorder %s21, 0
      %p83 = por %p81, %p82
      %p84 = scmp.ne.s32.totalorder %s76, %s78
      %p85 = scmp.eq.s32.totalorder %s26, 1
      %p86 = por %p84, %p85
      %p87 = scmp.ne.s32.totalorder %s78, %s79
      %p88 = scmp.eq.s32.totalorder %s26, 0
      %p89 = por %p87, %p88
      %p90 = scmp.ne.s32.totalorder %s78, %s79
      %p91 = scmp.eq.s32.totalorder %s27, 1
      %p92 = por %p90, %p91
      %p94 = scmp.ne.s32.totalorder %s79, %s93
      %p95 = scmp.eq.s32.totalorder %s27, 0
      %p96 = por %p94, %p95
      %s98 = sadd.s32 %s97, 1
      %p101 = scmp.eq.s32.totalorder %s21, 1
      %p102 = scmp.ne.s32.totalorder %s97, %s99
      %p103 = scmp.eq.s32.totalorder %s21, 0
      %p104 = por %p102, %p103
      %p105 = scmp.ne.s32.totalorder %s97, %s99
      %p106 = scmp.eq.s32.totalorder %s26, 1
      %p107 = por %p105, %p106
      %p108 = scmp.ne.s32.totalorder %s99, %s100
      %p109 = scmp.eq.s32.totalorder %s26, 0
      %p110 = por %p108, %p109
      %p111 = scmp.ne.s32.totalorder %s99, %s100
      %p112 = scmp.eq.s32.totalorder %s27, 1
      %p113 = por %p111, %p112
      %p115 = scmp.ne.s32.totalorder %s100, %s114
      %p116 = scmp.eq.s32.totalorder %s27, 0
      %p117 = por %p115, %p116
      %s119 = sadd.s32 %s118, 1
      %p122 = scmp.eq.s32.totalorder %s21, 1
      %p123 = scmp.ne.s32.totalorder %s118, %s120
      %p124 = scmp.eq.s32.totalorder %s21, 0
      %p125 = por %p123, %p124
      %p126 = scmp.ne.s32.totalorder %s118, %s120
      %p127 = scmp.eq.s32.totalorder %s26, 1
      %p128 = por %p126, %p127
      %p129 = scmp.ne.s32.totalorder %s120, %s121
      %p130 = scmp.eq.s32.totalorder %s26, 0
      %p131 = por %p129, %p130
      %p132 = scmp.ne.s32.totalorder %s120, %s121
      %p133 = scmp.eq.s32.totalorder %s27, 1
      %p134 = por %p132, %p133
      %p136 = scmp.ne.s32.totalorder %s121, %s135
      %p137 = scmp.eq.s32.totalorder %s27, 0
      %p138 = por %p136, %p137
      %s140 = sadd.s32 %s139, 1
      %p143 = scmp.eq.s32.totalorder %s21, 1
      %p144 = scmp.ne.s32.totalorder %s139, %s141
      %p145 = scmp.eq.s32.totalorder %s21, 0
      %p146 = por %p144, %p145
      %p147 = scmp.ne.s32.totalorder %s139, %s141
      %p148 = scmp.eq.s32.totalorder %s26, 1
      %p149 = por %p147, %p148
      %p150 = scmp.ne.s32.totalorder %s141, %s142
      %p151 = scmp.eq.s32.totalorder %s26, 0
      %p152 = por %p150, %p151
      %p153 = scmp.ne.s32.totalorder %s141, %s142
      %p154 = scmp.eq.s32.totalorder %s27, 1
      %p155 = por %p153, %p154
      %p157 = scmp.ne.s32.totalorder %s142, %s156
      %p158 = scmp.eq.s32.totalorder %s27, 0
      %p159 = por %p157, %p158
      %s161 = sadd.s32 %s160, 1
      %p164 = scmp.eq.s32.totalorder %s21, 1
      %p165 = scmp.ne.s32.totalorder %s160, %s162
      %p166 = scmp.eq.s32.totalorder %s21, 0
      %p167 = por %p165, %p166
      %p168 = scmp.ne.s32.totalorder %s160, %s162
      %p169 = scmp.eq.s32.totalorder %s26, 1
      %p170 = por %p168, %p169
      %p171 = scmp.ne.s32.totalorder %s162, %s163
      %p172 = scmp.eq.s32.totalorder %s26, 0
      %p173 = por %p171, %p172
      %p174 = scmp.ne.s32.totalorder %s162, %s163
      %p175 = scmp.eq.s32.totalorder %s27, 1
      %p176 = por %p174, %p175
      %p178 = scmp.ne.s32.totalorder %s163, %s177
      %p179 = scmp.eq.s32.totalorder %s27, 0
      %p180 = por %p178, %p179
      %s181 = ssub.s32 %s21, %s28
      %p182 = scmp.eq.s32.totalorder %s181, 0
      %s184 = sadd.s32 %s183, 1
      %s185 = scalar_select %p182, %s183, %s184
      %p188 = pneg %p182
      %p189 = scmp.eq.s32.totalorder %s21, 1
      %p190 = por %p188, %p189
      %p191 = scmp.ne.s32.totalorder %s183, %s186
      %p192 = scmp.eq.s32.totalorder %s21, 0
      %p193 = por %p191, %p192
      %p194 = scmp.ne.s32.totalorder %s183, %s186
      %p195 = scmp.eq.s32.totalorder %s26, 1
      %p196 = por %p194, %p195
      %p197 = scmp.ne.s32.totalorder %s186, %s187
      %p198 = scmp.eq.s32.totalorder %s26, 0
      %p199 = por %p197, %p198
      %p200 = scmp.ne.s32.totalorder %s186, %s187
      %p201 = scmp.eq.s32.totalorder %s27, 1
      %p202 = por %p200, %p201
      %p204 = scmp.ne.s32.totalorder %s187, %s203
      %p205 = scmp.eq.s32.totalorder %s27, 0
      %p206 = por %p204, %p205
      %p207 = scmp.le.s32.totalorder 1, %s21
      %p208 = scmp.lt.s32.totalorder %s21, 3
      %p209 = pnand %p207, %p208
      %p210 = pneg %p209
      // Predicated region
      $region9: #{tpu_custom_call.1} parent=5 // pred_check
        _
      $region10: #{tpu_custom_call.1} parent=5 // pred_check_branch
        %212 = sbr.rel (%p209) target = $region12
      $region11: #{tpu_custom_call.1} parent=5 // pred_region
        %s213 = ssub.s32 %s21, 1
        // Predicated region
        $region13: #{tpu_custom_call.1} parent=11 // pred_check
          %p214 = pneg %p68
        $region14: #{tpu_custom_call.1} parent=11 // pred_check_branch
          %216 = sbr.rel (%p214) target = $region16
        $region15: #{tpu_custom_call.1} parent=11 // pred_region
          %218 = vsyncadd [#allocation9], 0
          %s219 = sshll.u32 %s1, 4
          %s220 = int_to_ptr.hbm [resolvable:$true] %s219
          %s221 = sshll.u32 [#allocation8], 4
          %s222 = int_to_ptr.vmem [resolvable:$true] %s221
          %227 = dma.hbm_to_vmem [thread:$0]  %s220, 6144, %s222, [#allocation9], 384, 384, 24
        $region16: #{tpu_custom_call.1} parent=11 // pred_fallthru
          _
        // Predicated region
        $region17: #{tpu_custom_call.1} parent=11 // pred_check
          %p228 = pneg %p89
        $region18: #{tpu_custom_call.1} parent=11 // pred_check_branch
          %230 = sbr.rel (%p228) target = $region20
        $region19: #{tpu_custom_call.1} parent=11 // pred_region
          %232 = vsyncadd [#allocation9], 0
          %s233 = sshll.u32 %s2, 4
          %s234 = int_to_ptr.hbm [resolvable:$true] %s233
          %s235 = sshll.u32 [#allocation10], 4
          %s236 = int_to_ptr.vmem [resolvable:$true] %s235
          %241 = dma.hbm_to_vmem [thread:$0]  %s234, 6144, %s236, [#allocation9], 384, 384, 24
        $region20: #{tpu_custom_call.1} parent=11 // pred_fallthru
          _
        // Predicated region
        $region21: #{tpu_custom_call.1} parent=11 // pred_check
          %p242 = pneg %p110
        $region22: #{tpu_custom_call.1} parent=11 // pred_check_branch
          %244 = sbr.rel (%p242) target = $region24
        $region23: #{tpu_custom_call.1} parent=11 // pred_region
          %246 = vsyncadd [#allocation12], 0
          %s247 = sshll.u32 %s3, 4
          %s248 = int_to_ptr.hbm [resolvable:$true] %s247
          %s249 = sshll.u32 [#allocation11], 4
          %s250 = int_to_ptr.vmem [resolvable:$true] %s249
          %255 = dma.hbm_to_vmem [thread:$0]  %s248, 2048, %s250, [#allocation12], 128, 128, 8
        $region24: #{tpu_custom_call.1} parent=11 // pred_fallthru
          _
        // Predicated region
        $region25: #{tpu_custom_call.1} parent=11 // pred_check
          %p256 = pneg %p131
        $region26: #{tpu_custom_call.1} parent=11 // pred_check_branch
          %258 = sbr.rel (%p256) target = $region28
        $region27: #{tpu_custom_call.1} parent=11 // pred_region
          _
        $region28: #{tpu_custom_call.1} parent=11 // pred_fallthru
          _
        // Predicated region
        $region29: #{tpu_custom_call.1} parent=11 // pred_check
          %p259 = pneg %p152
        $region30: #{tpu_custom_call.1} parent=11 // pred_check_branch
          %261 = sbr.rel (%p259) target = $region32
        $region31: #{tpu_custom_call.1} parent=11 // pred_region
          _
        $region32: #{tpu_custom_call.1} parent=11 // pred_fallthru
          _
        // Predicated region
        $region33: #{tpu_custom_call.1} parent=11 // pred_check
          %p262 = pneg %p173
        $region34: #{tpu_custom_call.1} parent=11 // pred_check_branch
          %264 = sbr.rel (%p262) target = $region36
        $region35: #{tpu_custom_call.1} parent=11 // pred_region
          _
        $region36: #{tpu_custom_call.1} parent=11 // pred_fallthru
          _
      $region12: #{tpu_custom_call.1} parent=5 // pred_fallthru
        _
      %p265 = scmp.lt.s32.totalorder %s21, 2
      // Predicated region
      $region37: #{tpu_custom_call.1} parent=5 // pred_check
        %p266 = pneg %p265
      $region38: #{tpu_custom_call.1} parent=5 // pred_check_branch
        %268 = sbr.rel (%p266) target = $region40
      $region39: #{tpu_custom_call.1} parent=5 // pred_region
        // Predicated region
        $region41: #{tpu_custom_call.1} parent=39 // pred_check
          %p269 = pneg %p41
        $region42: #{tpu_custom_call.1} parent=39 // pred_check_branch
          %271 = sbr.rel (%p269) target = $region44
        $region43: #{tpu_custom_call.1} parent=39 // pred_region
          %s272 = sand.u32 %s31, 1
          %s273 = scalar_lea.sflag [#allocation6], %s272
          %s274 = sand.u32 %s31, 1
          %s275 = smul.addr %s274, 32
          %s276 = scalar_lea.vmem [#allocation5], %s275
          %s277 = smul.u32 4, %s21
          %279 = vsyncadd %s273, 0
          %s280 = smul.addr %s277, 8
          %s281 = scalar_lea.hbm %s0, %s280
          %s282 = sshll.u32 %s281, 4
          %s283 = int_to_ptr.hbm [resolvable:$true] %s282
          %s284 = sshll.u32 %s276, 4
          %s285 = int_to_ptr.vmem [resolvable:$true] %s284
          %290 = dma.hbm_to_vmem [thread:$0]  %s283, 512, %s285, %s273, 128, 128, 8
        $region44: #{tpu_custom_call.1} parent=39 // pred_fallthru
          _
      $region40: #{tpu_custom_call.1} parent=5 // pred_fallthru
        _
      %p291 = scmp.le.s32.totalorder 1, %s21
      %p292 = scmp.lt.s32.totalorder %s21, 3
      %p293 = pnand %p291, %p292
      %p294 = pneg %p293
      // Predicated region
      $region45: #{tpu_custom_call.1} parent=5 // pred_check
        _
      $region46: #{tpu_custom_call.1} parent=5 // pred_check_branch
        %296 = sbr.rel (%p293) target = $region48
      $region47: #{tpu_custom_call.1} parent=5 // pred_region
        %s297 = ssub.s32 %s21, 1
        %s298 = sand.u32 %s34, 1
        %s299 = scalar_lea.sflag [#allocation6], %s298
        %s300 = sand.u32 %s34, 1
        %s301 = smul.addr %s300, 32
        %s302 = scalar_lea.vmem [#allocation5], %s301
        // Predicated region
        $region49: #{tpu_custom_call.1} parent=47 // pred_check
          %p303 = pneg %p47
        $region50: #{tpu_custom_call.1} parent=47 // pred_check_branch
          %305 = sbr.rel (%p303) target = $region52
        $region51: #{tpu_custom_call.1} parent=47 // pred_region
          %307 = dma.done %s299, 512
        $region52: #{tpu_custom_call.1} parent=47 // pred_fallthru
          _
        // Predicated region
        $region53: #{tpu_custom_call.1} parent=47 // pred_check
          %p308 = pneg %p68
        $region54: #{tpu_custom_call.1} parent=47 // pred_check_branch
          %310 = sbr.rel (%p308) target = $region56
        $region55: #{tpu_custom_call.1} parent=47 // pred_region
          %312 = dma.done [#allocation9], 6144
        $region56: #{tpu_custom_call.1} parent=47 // pred_fallthru
          _
        // Predicated region
        $region57: #{tpu_custom_call.1} parent=47 // pred_check
          %p313 = pneg %p89
        $region58: #{tpu_custom_call.1} parent=47 // pred_check_branch
          %315 = sbr.rel (%p313) target = $region60
        $region59: #{tpu_custom_call.1} parent=47 // pred_region
          %317 = dma.done [#allocation9], 6144
        $region60: #{tpu_custom_call.1} parent=47 // pred_fallthru
          _
        // Predicated region
        $region61: #{tpu_custom_call.1} parent=47 // pred_check
          %p318 = pneg %p110
        $region62: #{tpu_custom_call.1} parent=47 // pred_check_branch
          %320 = sbr.rel (%p318) target = $region64
        $region63: #{tpu_custom_call.1} parent=47 // pred_region
          %322 = dma.done [#allocation12], 2048
        $region64: #{tpu_custom_call.1} parent=47 // pred_fallthru
          _
        %s323 = sand.u32 %s34, 1
        %s324 = scalar_lea.sflag [#allocation6], %s323
        %s325 = sand.u32 %s34, 1
        %s326 = smul.addr %s325, 32
        %s327 = scalar_lea.vmem [#allocation5], %s326
        %p328 = pneg %p47
        %p329 = pneg %p44
        %p330 = pneg %p68
        %p331 = pneg %p65
        %p332 = pneg %p89
        %p333 = pneg %p86
        %p334 = pneg %p110
        %p335 = pneg %p107
        %p336 = pneg %p131
        %p337 = pneg %p128
        %p338 = pneg %p152
        %p339 = pneg %p149
        %p340 = pneg %p173
        %p341 = pneg %p170
        %p342 = pneg %p199
        %p343 = pneg %p196
        %s344 = sand.u32 %s186, 1
        %s345 = scalar_lea.sflag [#allocation7], %s344
        %s346 = sand.u32 %s186, 1
        %s347 = smul.addr %s346, 32
        %s348 = scalar_lea.vmem [#allocation13], %s347
        %s349 = smul.u32 4, %s26
        %s350 = smul.u32 4, %s26
        %p351 = scmp.eq.s32.totalorder %s26, 0
        // Predicated region
        $region65: #{tpu_custom_call.1} parent=47 // pred_check
          %p352 = pneg %p351
        $region66: #{tpu_custom_call.1} parent=47 // pred_check_branch
          %354 = sbr.rel (%p352) target = $region68
        $region67: #{tpu_custom_call.1} parent=47 // pred_region
          %355 = vst [vmem:[#allocation2] sm:$0xff] 0.0
        $region68: #{tpu_custom_call.1} parent=47 // pred_fallthru
          _
        %v356 = vld [vmem:[%s302] sm:$0xff]
        %v357 = vld [vmem:[%s302 + $0x8] sm:$0xff]
        %v358 = vld [vmem:[%s302 + $0x10] sm:$0xff]
        %v359 = vld [vmem:[%s302 + $0x18] sm:$0xff]
        %v360 = vld [vmem:[#allocation8] sm:$0xff]
        %v361 = vld [vmem:[#allocation8 + $0x8] sm:$0xff]
        %v362 = vld [vmem:[#allocation8 + $0x10] sm:$0xff]
        %v363 = vld [vmem:[#allocation8 + $0x18] sm:$0xff]
        %v364 = vld [vmem:[#allocation8 + $0x20] sm:$0xff]
        %v365 = vld [vmem:[#allocation8 + $0x28] sm:$0xff]
        %v366 = vld [vmem:[#allocation8 + $0x30] sm:$0xff]
        %v367 = vld [vmem:[#allocation8 + $0x38] sm:$0xff]
        %v368 = vld [vmem:[#allocation8 + $0x40] sm:$0xff]
        %v369 = vld [vmem:[#allocation8 + $0x48] sm:$0xff]
        %v370 = vld [vmem:[#allocation8 + $0x50] sm:$0xff]
        %v371 = vld [vmem:[#allocation8 + $0x58] sm:$0xff]
        %v372 = vld [vmem:[#allocation8 + $0x60] sm:$0xff]
        %v373 = vld [vmem:[#allocation8 + $0x68] sm:$0xff]
        %v374 = vld [vmem:[#allocation8 + $0x70] sm:$0xff]
        %v375 = vld [vmem:[#allocation8 + $0x78] sm:$0xff]
        %v376 = vld [vmem:[#allocation8 + $0x80] sm:$0xff]
        %v377 = vld [vmem:[#allocation8 + $0x88] sm:$0xff]
        %v378 = vld [vmem:[#allocation8 + $0x90] sm:$0xff]
        %v379 = vld [vmem:[#allocation8 + $0x98] sm:$0xff]
        %v380 = vld [vmem:[#allocation8 + $0xa0] sm:$0xff]
        %v381 = vld [vmem:[#allocation8 + $0xa8] sm:$0xff]
        %v382 = vld [vmem:[#allocation8 + $0xb0] sm:$0xff]
        %v383 = vld [vmem:[#allocation8 + $0xb8] sm:$0xff]
        %v384 = vld [vmem:[#allocation8 + $0xc0] sm:$0xff]
        %v385 = vld [vmem:[#allocation8 + $0xc8] sm:$0xff]
        %v386 = vld [vmem:[#allocation8 + $0xd0] sm:$0xff]
        %v387 = vld [vmem:[#allocation8 + $0xd8] sm:$0xff]
        %v388 = vld [vmem:[#allocation8 + $0xe0] sm:$0xff]
        %v389 = vld [vmem:[#allocation8 + $0xe8] sm:$0xff]
        %v390 = vld [vmem:[#allocation8 + $0xf0] sm:$0xff]
        %v391 = vld [vmem:[#allocation8 + $0xf8] sm:$0xff]
        %v392 = vld [vmem:[#allocation8 + $0x100] sm:$0xff]
        %v393 = vld [vmem:[#allocation8 + $0x108] sm:$0xff]
        %v394 = vld [vmem:[#allocation8 + $0x110] sm:$0xff]
        %v395 = vld [vmem:[#allocation8 + $0x118] sm:$0xff]
        %v396 = vld [vmem:[#allocation8 + $0x120] sm:$0xff]
        %v397 = vld [vmem:[#allocation8 + $0x128] sm:$0xff]
        %v398 = vld [vmem:[#allocation8 + $0x130] sm:$0xff]
        %v399 = vld [vmem:[#allocation8 + $0x138] sm:$0xff]
        %v400 = vld [vmem:[#allocation8 + $0x140] sm:$0xff]
        %v401 = vld [vmem:[#allocation8 + $0x148] sm:$0xff]
        %v402 = vld [vmem:[#allocation8 + $0x150] sm:$0xff]
        %v403 = vld [vmem:[#allocation8 + $0x158] sm:$0xff]
        %v404 = vld [vmem:[#allocation8 + $0x160] sm:$0xff]
        %v405 = vld [vmem:[#allocation8 + $0x168] sm:$0xff]
        %v406 = vld [vmem:[#allocation8 + $0x170] sm:$0xff]
        %v407 = vld [vmem:[#allocation8 + $0x178] sm:$0xff]
        %v408 = vld [vmem:[%s4] sm:$0x7]
        %v410 = vperm.slane %v408, 0
        %v411 = vperm.slane %v408, 1
        %v412 = vperm.slane %v408, 2
        %416 = vmatpush.msra.mxu0 %v405
        %417 = vmatpush.msra.mxu0 %v402
        %418 = vmatpush.msra.mxu0 %v399
        %419 = vmatpush.msra.mxu0 %v396
        %420 = vmatpush.msra.mxu0 %v393
        %421 = vmatpush.msra.mxu0 %v390
        %422 = vmatpush.msra.mxu0 %v387
        %423 = vmatpush.msra.mxu0 %v384
        %424 = vmatpush.msra.mxu0 %v381
        %425 = vmatpush.msra.mxu0 %v378
        %426 = vmatpush.msra.mxu0 %v375
        %427 = vmatpush.msra.mxu0 %v372
        %428 = vmatpush.msra.mxu0 %v369
        %429 = vmatpush.msra.mxu0 %v366
        %430 = vmatpush.msra.mxu0 %v363
        %431 = vmatpush.msra.mxu0 %v360
        %432 = vmatmul.f32.gmra.mxu0 %v356
        %v433 = vpop.f32.mrf.mxu0
        %v434 = vadd.f32 %v410, %v433
        %435 = vmatmul.f32.gmra.mxu0 %v357
        %v436 = vpop.f32.mrf.mxu0
        %v437 = vadd.f32 %v410, %v436
        %438 = vmatmul.f32.gmra.mxu0 %v358
        %v439 = vpop.f32.mrf.mxu0
        %v440 = vadd.f32 %v410, %v439
        %441 = vmatmul.f32.gmra.mxu0 %v359
        %v442 = vpop.f32.mrf.mxu0
        %v443 = vadd.f32 %v410, %v442
        %444 = vdwg.mxu0
        %445 = vmatpush.msra.mxu0 %v406
        %446 = vmatpush.msra.mxu0 %v403
        %447 = vmatpush.msra.mxu0 %v400
        %448 = vmatpush.msra.mxu0 %v397
        %449 = vmatpush.msra.mxu0 %v394
        %450 = vmatpush.msra.mxu0 %v391
        %451 = vmatpush.msra.mxu0 %v388
        %452 = vmatpush.msra.mxu0 %v385
        %453 = vmatpush.msra.mxu0 %v382
        %454 = vmatpush.msra.mxu0 %v379
        %455 = vmatpush.msra.mxu0 %v376
        %456 = vmatpush.msra.mxu0 %v373
        %457 = vmatpush.msra.mxu0 %v370
        %458 = vmatpush.msra.mxu0 %v367
        %459 = vmatpush.msra.mxu0 %v364
        %460 = vmatpush.msra.mxu0 %v361
        %461 = vmatmul.f32.gmra.mxu0 %v356
        %v462 = vpop.f32.mrf.mxu0
        %v463 = vadd.f32 %v411, %v462
        %464 = vmatmul.f32.gmra.mxu0 %v357
        %v465 = vpop.f32.mrf.mxu0
        %v466 = vadd.f32 %v411, %v465
        %467 = vmatmul.f32.gmra.mxu0 %v358
        %v468 = vpop.f32.mrf.mxu0
        %v469 = vadd.f32 %v411, %v468
        %470 = vmatmul.f32.gmra.mxu0 %v359
        %v471 = vpop.f32.mrf.mxu0
        %v472 = vadd.f32 %v411, %v471
        %473 = vdwg.mxu0
        %474 = vmatpush.msra.mxu0 %v407
        %475 = vmatpush.msra.mxu0 %v404
        %476 = vmatpush.msra.mxu0 %v401
        %477 = vmatpush.msra.mxu0 %v398
        %478 = vmatpush.msra.mxu0 %v395
        %479 = vmatpush.msra.mxu0 %v392
        %480 = vmatpush.msra.mxu0 %v389
        %481 = vmatpush.msra.mxu0 %v386
        %482 = vmatpush.msra.mxu0 %v383
        %483 = vmatpush.msra.mxu0 %v380
        %484 = vmatpush.msra.mxu0 %v377
        %485 = vmatpush.msra.mxu0 %v374
        %486 = vmatpush.msra.mxu0 %v371
        %487 = vmatpush.msra.mxu0 %v368
        %488 = vmatpush.msra.mxu0 %v365
        %489 = vmatpush.msra.mxu0 %v362
        %490 = vmatmul.f32.gmra.mxu0 %v356
        %v491 = vpop.f32.mrf.mxu0
        %v492 = vadd.f32 %v412, %v491
        %493 = vmatmul.f32.gmra.mxu0 %v357
        %v494 = vpop.f32.mrf.mxu0
        %v495 = vadd.f32 %v412, %v494
        %496 = vmatmul.f32.gmra.mxu0 %v358
        %v497 = vpop.f32.mrf.mxu0
        %v498 = vadd.f32 %v412, %v497
        %499 = vmatmul.f32.gmra.mxu0 %v359
        %v500 = vpop.f32.mrf.mxu0
        %v501 = vadd.f32 %v412, %v500
        %502 = vdwg.mxu0
        %503 = vst [vmem:[#allocation3] sm:$0xff] %v434
        %504 = vst [vmem:[#allocation3 + $0x8] sm:$0xff] %v463
        %505 = vst [vmem:[#allocation3 + $0x10] sm:$0xff] %v492
        %506 = vst [vmem:[#allocation3 + $0x18] sm:$0xff] %v437
        %507 = vst [vmem:[#allocation3 + $0x20] sm:$0xff] %v466
        %508 = vst [vmem:[#allocation3 + $0x28] sm:$0xff] %v495
        %509 = vst [vmem:[#allocation3 + $0x30] sm:$0xff] %v440
        %510 = vst [vmem:[#allocation3 + $0x38] sm:$0xff] %v469
        %511 = vst [vmem:[#allocation3 + $0x40] sm:$0xff] %v498
        %512 = vst [vmem:[#allocation3 + $0x48] sm:$0xff] %v443
        %513 = vst [vmem:[#allocation3 + $0x50] sm:$0xff] %v472
        %514 = vst [vmem:[#allocation3 + $0x58] sm:$0xff] %v501
        %v515 = vld [vmem:[#allocation10] sm:$0xff]
        %v516 = vld [vmem:[#allocation10 + $0x8] sm:$0xff]
        %v517 = vld [vmem:[#allocation10 + $0x10] sm:$0xff]
        %v518 = vld [vmem:[#allocation10 + $0x18] sm:$0xff]
        %v519 = vld [vmem:[#allocation10 + $0x20] sm:$0xff]
        %v520 = vld [vmem:[#allocation10 + $0x28] sm:$0xff]
        %v521 = vld [vmem:[#allocation10 + $0x30] sm:$0xff]
        %v522 = vld [vmem:[#allocation10 + $0x38] sm:$0xff]
        %v523 = vld [vmem:[#allocation10 + $0x40] sm:$0xff]
        %v524 = vld [vmem:[#allocation10 + $0x48] sm:$0xff]
        %v525 = vld [vmem:[#allocation10 + $0x50] sm:$0xff]
        %v526 = vld [vmem:[#allocation10 + $0x58] sm:$0xff]
        %v527 = vld [vmem:[#allocation10 + $0x60] sm:$0xff]
        %v528 = vld [vmem:[#allocation10 + $0x68] sm:$0xff]
        %v529 = vld [vmem:[#allocation10 + $0x70] sm:$0xff]
        %v530 = vld [vmem:[#allocation10 + $0x78] sm:$0xff]
        %v531 = vld [vmem:[#allocation10 + $0x80] sm:$0xff]
        %v532 = vld [vmem:[#allocation10 + $0x88] sm:$0xff]
        %v533 = vld [vmem:[#allocation10 + $0x90] sm:$0xff]
        %v534 = vld [vmem:[#allocation10 + $0x98] sm:$0xff]
        %v535 = vld [vmem:[#allocation10 + $0xa0] sm:$0xff]
        %v536 = vld [vmem:[#allocation10 + $0xa8] sm:$0xff]
        %v537 = vld [vmem:[#allocation10 + $0xb0] sm:$0xff]
        %v538 = vld [vmem:[#allocation10 + $0xb8] sm:$0xff]
        %v539 = vld [vmem:[#allocation10 + $0xc0] sm:$0xff]
        %v540 = vld [vmem:[#allocation10 + $0xc8] sm:$0xff]
        %v541 = vld [vmem:[#allocation10 + $0xd0] sm:$0xff]
        %v542 = vld [vmem:[#allocation10 + $0xd8] sm:$0xff]
        %v543 = vld [vmem:[#allocation10 + $0xe0] sm:$0xff]
        %v544 = vld [vmem:[#allocation10 + $0xe8] sm:$0xff]
        %v545 = vld [vmem:[#allocation10 + $0xf0] sm:$0xff]
        %v546 = vld [vmem:[#allocation10 + $0xf8] sm:$0xff]
        %v547 = vld [vmem:[#allocation10 + $0x100] sm:$0xff]
        %v548 = vld [vmem:[#allocation10 + $0x108] sm:$0xff]
        %v549 = vld [vmem:[#allocation10 + $0x110] sm:$0xff]
        %v550 = vld [vmem:[#allocation10 + $0x118] sm:$0xff]
        %v551 = vld [vmem:[#allocation10 + $0x120] sm:$0xff]
        %v552 = vld [vmem:[#allocation10 + $0x128] sm:$0xff]
        %v553 = vld [vmem:[#allocation10 + $0x130] sm:$0xff]
        %v554 = vld [vmem:[#allocation10 + $0x138] sm:$0xff]
        %v555 = vld [vmem:[#allocation10 + $0x140] sm:$0xff]
        %v556 = vld [vmem:[#allocation10 + $0x148] sm:$0xff]
        %v557 = vld [vmem:[#allocation10 + $0x150] sm:$0xff]
        %v558 = vld [vmem:[#allocation10 + $0x158] sm:$0xff]
        %v559 = vld [vmem:[#allocation10 + $0x160] sm:$0xff]
        %v560 = vld [vmem:[#allocation10 + $0x168] sm:$0xff]
        %v561 = vld [vmem:[#allocation10 + $0x170] sm:$0xff]
        %v562 = vld [vmem:[#allocation10 + $0x178] sm:$0xff]
        %v563 = vld [vmem:[%s5] sm:$0x1]
        %v565 = vperm.slane %v563, 0
        %v567 = vld [vmem:[#allocation2] sm:$0xff]
        %s568 = smul.u32 0, 3
        %s569 = smul.addr %s568, 8
        %s570 = scalar_lea.vmem [#allocation3], %s569
        %v571 = vld [vmem:[%s570] sm:$0xff]
        %v572 = vld [vmem:[%s570 + $0x8] sm:$0xff]
        %v573 = vld [vmem:[%s570 + $0x10] sm:$0xff]
        %574 = vmatpush.msra.mxu0 %v560
        %575 = vmatpush.msra.mxu0 %v557
        %576 = vmatpush.msra.mxu0 %v554
        %577 = vmatpush.msra.mxu0 %v551
        %578 = vmatpush.msra.mxu0 %v548
        %579 = vmatpush.msra.mxu0 %v545
        %580 = vmatpush.msra.mxu0 %v542
        %581 = vmatpush.msra.mxu0 %v539
        %582 = vmatpush.msra.mxu0 %v536
        %583 = vmatpush.msra.mxu0 %v533
        %584 = vmatpush.msra.mxu0 %v530
        %585 = vmatpush.msra.mxu0 %v527
        %586 = vmatpush.msra.mxu0 %v524
        %587 = vmatpush.msra.mxu0 %v521
        %588 = vmatpush.msra.mxu0 %v518
        %589 = vmatpush.msra.mxu0 %v515
        %590 = vmatmul.f32.gmra.mxu0 %v567
        %v591 = vpop.f32.mrf.mxu0
        %v592 = vadd.f32 0.0, %v591
        %593 = vdwg.mxu0
        %594 = vmatpush.msra.mxu0 %v561
        %595 = vmatpush.msra.mxu0 %v558
        %596 = vmatpush.msra.mxu0 %v555
        %597 = vmatpush.msra.mxu0 %v552
        %598 = vmatpush.msra.mxu0 %v549
        %599 = vmatpush.msra.mxu0 %v546
        %600 = vmatpush.msra.mxu0 %v543
        %601 = vmatpush.msra.mxu0 %v540
        %602 = vmatpush.msra.mxu0 %v537
        %603 = vmatpush.msra.mxu0 %v534
        %604 = vmatpush.msra.mxu0 %v531
        %605 = vmatpush.msra.mxu0 %v528
        %606 = vmatpush.msra.mxu0 %v525
        %607 = vmatpush.msra.mxu0 %v522
        %608 = vmatpush.msra.mxu0 %v519
        %609 = vmatpush.msra.mxu0 %v516
        %610 = vmatmul.f32.gmra.mxu0 %v567
        %v611 = vpop.f32.mrf.mxu0
        %v612 = vadd.f32 0.0, %v611
        %613 = vdwg.mxu0
        %614 = vmatpush.msra.mxu0 %v562
        %615 = vmatpush.msra.mxu0 %v559
        %616 = vmatpush.msra.mxu0 %v556
        %617 = vmatpush.msra.mxu0 %v553
        %618 = vmatpush.msra.mxu0 %v550
        %619 = vmatpush.msra.mxu0 %v547
        %620 = vmatpush.msra.mxu0 %v544
        %621 = vmatpush.msra.mxu0 %v541
        %622 = vmatpush.msra.mxu0 %v538
        %623 = vmatpush.msra.mxu0 %v535
        %624 = vmatpush.msra.mxu0 %v532
        %625 = vmatpush.msra.mxu0 %v529
        %626 = vmatpush.msra.mxu0 %v526
        %627 = vmatpush.msra.mxu0 %v523
        %628 = vmatpush.msra.mxu0 %v520
        %629 = vmatpush.msra.mxu0 %v517
        %630 = vmatmul.f32.gmra.mxu0 %v567
        %v631 = vpop.f32.mrf.mxu0
        %v632 = vadd.f32 0.0, %v631
        %633 = vdwg.mxu0
        %v634 = vadd.f32 %v571, %v592
        %v635 = vsub.f32 0.0, %v634
        %v636 = vmul.f32 %v635, 1.442695
        %v637 = vpow.pop %v636
        %v638 = vadd.f32 %v637, 1.0
        %v639 = vrcp.pop %v638
        %v640 = vmul.f32 %v638, %v639
        %v641 = vsub.f32 1.0, %v640
        %v642 = vmul.f32 %v639, %v641
        %v643 = vadd.f32 %v639, %v642
        %vm644 = vweird.f32 %v638
        %vm645 = vweird.f32 %v639
        %vm646 = vmor %vm644, %vm645
        %v647 = vsel %vm646, %v639, %v643
        %v648 = vand.u32 2147483647, %v638
        %vm649 = vcmp.eq.f32.partialorder %v648, 8.507059e+37
        %v650 = vand.u32 %v638, 2147483648
        %v651 = vor.u32 1.1754944e-38, %v650
        %v652 = vsel %vm649, %v651, %v647
        %v653 = vmul.f32 1.0, %v652
        %v654 = vadd.f32 %v572, %v612
        %v655 = vsub.f32 0.0, %v654
        %v656 = vmul.f32 %v655, 1.442695
        %v657 = vpow.pop %v656
        %v658 = vadd.f32 %v657, 1.0
        %v659 = vrcp.pop %v658
        %v660 = vmul.f32 %v658, %v659
        %v661 = vsub.f32 1.0, %v660
        %v662 = vmul.f32 %v659, %v661
        %v663 = vadd.f32 %v659, %v662
        %vm664 = vweird.f32 %v658
        %vm665 = vweird.f32 %v659
        %vm666 = vmor %vm664, %vm665
        %v667 = vsel %vm666, %v659, %v663
        %v668 = vand.u32 2147483647, %v658
        %vm669 = vcmp.eq.f32.partialorder %v668, 8.507059e+37
        %v670 = vand.u32 %v658, 2147483648
        %v671 = vor.u32 1.1754944e-38, %v670
        %v672 = vsel %vm669, %v671, %v667
        %v673 = vmul.f32 1.0, %v672
        %v674 = vadd.f32 %v632, %v565
        %v675 = vmul.f32 %v653, %v674
        %v676 = vadd.f32 %v573, %v675
        %v677 = vtanh.pop %v676
        %v678 = vsub.f32 %v567, %v677
        %v679 = vmul.f32 %v673, %v678
        %v680 = vadd.f32 %v677, %v679
        %681 = vst [vmem:[#allocation4] sm:$0xff] %v680
        %s682 = smul.u32 1, 3
        %s683 = smul.addr %s682, 8
        %s684 = scalar_lea.vmem [#allocation3], %s683
        %v685 = vld [vmem:[%s684] sm:$0xff]
        %v686 = vld [vmem:[%s684 + $0x8] sm:$0xff]
        %v687 = vld [vmem:[%s684 + $0x10] sm:$0xff]
        %688 = vmatpush.msra.mxu0 %v560
        %689 = vmatpush.msra.mxu0 %v557
        %690 = vmatpush.msra.mxu0 %v554
        %691 = vmatpush.msra.mxu0 %v551
        %692 = vmatpush.msra.mxu0 %v548
        %693 = vmatpush.msra.mxu0 %v545
        %694 = vmatpush.msra.mxu0 %v542
        %695 = vmatpush.msra.mxu0 %v539
        %696 = vmatpush.msra.mxu0 %v536
        %697 = vmatpush.msra.mxu0 %v533
        %698 = vmatpush.msra.mxu0 %v530
        %699 = vmatpush.msra.mxu0 %v527
        %700 = vmatpush.msra.mxu0 %v524
        %701 = vmatpush.msra.mxu0 %v521
        %702 = vmatpush.msra.mxu0 %v518
        %703 = vmatpush.msra.mxu0 %v515
        %704 = vmatmul.f32.gmra.mxu0 %v680
        %v705 = vpop.f32.mrf.mxu0
        %v706 = vadd.f32 0.0, %v705
        %707 = vdwg.mxu0
        %708 = vmatpush.msra.mxu0 %v561
        %709 = vmatpush.msra.mxu0 %v558
        %710 = vmatpush.msra.mxu0 %v555
        %711 = vmatpush.msra.mxu0 %v552
        %712 = vmatpush.msra.mxu0 %v549
        %713 = vmatpush.msra.mxu0 %v546
        %714 = vmatpush.msra.mxu0 %v543
        %715 = vmatpush.msra.mxu0 %v540
        %716 = vmatpush.msra.mxu0 %v537
        %717 = vmatpush.msra.mxu0 %v534
        %718 = vmatpush.msra.mxu0 %v531
        %719 = vmatpush.msra.mxu0 %v528
        %720 = vmatpush.msra.mxu0 %v525
        %721 = vmatpush.msra.mxu0 %v522
        %722 = vmatpush.msra.mxu0 %v519
        %723 = vmatpush.msra.mxu0 %v516
        %724 = vmatmul.f32.gmra.mxu0 %v680
        %v725 = vpop.f32.mrf.mxu0
        %v726 = vadd.f32 0.0, %v725
        %727 = vdwg.mxu0
        %728 = vmatpush.msra.mxu0 %v562
        %729 = vmatpush.msra.mxu0 %v559
        %730 = vmatpush.msra.mxu0 %v556
        %731 = vmatpush.msra.mxu0 %v553
        %732 = vmatpush.msra.mxu0 %v550
        %733 = vmatpush.msra.mxu0 %v547
        %734 = vmatpush.msra.mxu0 %v544
        %735 = vmatpush.msra.mxu0 %v541
        %736 = vmatpush.msra.mxu0 %v538
        %737 = vmatpush.msra.mxu0 %v535
        %738 = vmatpush.msra.mxu0 %v532
        %739 = vmatpush.msra.mxu0 %v529
        %740 = vmatpush.msra.mxu0 %v526
        %741 = vmatpush.msra.mxu0 %v523
        %742 = vmatpush.msra.mxu0 %v520
        %743 = vmatpush.msra.mxu0 %v517
        %744 = vmatmul.f32.gmra.mxu0 %v680
        %v745 = vpop.f32.mrf.mxu0
        %v746 = vadd.f32 0.0, %v745
        %747 = vdwg.mxu0
        %v748 = vadd.f32 %v685, %v706
        %v749 = vsub.f32 0.0, %v748
        %v750 = vmul.f32 %v749, 1.442695
        %v751 = vpow.pop %v750
        %v752 = vadd.f32 %v751, 1.0
        %v753 = vrcp.pop %v752
        %v754 = vmul.f32 %v752, %v753
        %v755 = vsub.f32 1.0, %v754
        %v756 = vmul.f32 %v753, %v755
        %v757 = vadd.f32 %v753, %v756
        %vm758 = vweird.f32 %v752
        %vm759 = vweird.f32 %v753
        %vm760 = vmor %vm758, %vm759
        %v761 = vsel %vm760, %v753, %v757
        %v762 = vand.u32 2147483647, %v752
        %vm763 = vcmp.eq.f32.partialorder %v762, 8.507059e+37
        %v764 = vand.u32 %v752, 2147483648
        %v765 = vor.u32 1.1754944e-38, %v764
        %v766 = vsel %vm763, %v765, %v761
        %v767 = vmul.f32 1.0, %v766
        %v768 = vadd.f32 %v686, %v726
        %v769 = vsub.f32 0.0, %v768
        %v770 = vmul.f32 %v769, 1.442695
        %v771 = vpow.pop %v770
        %v772 = vadd.f32 %v771, 1.0
        %v773 = vrcp.pop %v772
        %v774 = vmul.f32 %v772, %v773
        %v775 = vsub.f32 1.0, %v774
        %v776 = vmul.f32 %v773, %v775
        %v777 = vadd.f32 %v773, %v776
        %vm778 = vweird.f32 %v772
        %vm779 = vweird.f32 %v773
        %vm780 = vmor %vm778, %vm779
        %v781 = vsel %vm780, %v773, %v777
        %v782 = vand.u32 2147483647, %v772
        %vm783 = vcmp.eq.f32.partialorder %v782, 8.507059e+37
        %v784 = vand.u32 %v772, 2147483648
        %v785 = vor.u32 1.1754944e-38, %v784
        %v786 = vsel %vm783, %v785, %v781
        %v787 = vmul.f32 1.0, %v786
        %v788 = vadd.f32 %v746, %v565
        %v789 = vmul.f32 %v767, %v788
        %v790 = vadd.f32 %v687, %v789
        %v791 = vtanh.pop %v790
        %v792 = vsub.f32 %v680, %v791
        %v793 = vmul.f32 %v787, %v792
        %v794 = vadd.f32 %v791, %v793
        %s795 = scalar_lea.vmem [#allocation4], 8
        %796 = vst [vmem:[%s795] sm:$0xff] %v794
        %s797 = smul.u32 2, 3
        %s798 = smul.addr %s797, 8
        %s799 = scalar_lea.vmem [#allocation3], %s798
        %v800 = vld [vmem:[%s799] sm:$0xff]
        %v801 = vld [vmem:[%s799 + $0x8] sm:$0xff]
        %v802 = vld [vmem:[%s799 + $0x10] sm:$0xff]
        %803 = vmatpush.msra.mxu0 %v560
        %804 = vmatpush.msra.mxu0 %v557
        %805 = vmatpush.msra.mxu0 %v554
        %806 = vmatpush.msra.mxu0 %v551
        %807 = vmatpush.msra.mxu0 %v548
        %808 = vmatpush.msra.mxu0 %v545
        %809 = vmatpush.msra.mxu0 %v542
        %810 = vmatpush.msra.mxu0 %v539
        %811 = vmatpush.msra.mxu0 %v536
        %812 = vmatpush.msra.mxu0 %v533
        %813 = vmatpush.msra.mxu0 %v530
        %814 = vmatpush.msra.mxu0 %v527
        %815 = vmatpush.msra.mxu0 %v524
        %816 = vmatpush.msra.mxu0 %v521
        %817 = vmatpush.msra.mxu0 %v518
        %818 = vmatpush.msra.mxu0 %v515
        %819 = vmatmul.f32.gmra.mxu0 %v794
        %v820 = vpop.f32.mrf.mxu0
        %v821 = vadd.f32 0.0, %v820
        %822 = vdwg.mxu0
        %823 = vmatpush.msra.mxu0 %v561
        %824 = vmatpush.msra.mxu0 %v558
        %825 = vmatpush.msra.mxu0 %v555
        %826 = vmatpush.msra.mxu0 %v552
        %827 = vmatpush.msra.mxu0 %v549
        %828 = vmatpush.msra.mxu0 %v546
        %829 = vmatpush.msra.mxu0 %v543
        %830 = vmatpush.msra.mxu0 %v540
        %831 = vmatpush.msra.mxu0 %v537
        %832 = vmatpush.msra.mxu0 %v534
        %833 = vmatpush.msra.mxu0 %v531
        %834 = vmatpush.msra.mxu0 %v528
        %835 = vmatpush.msra.mxu0 %v525
        %836 = vmatpush.msra.mxu0 %v522
        %837 = vmatpush.msra.mxu0 %v519
        %838 = vmatpush.msra.mxu0 %v516
        %839 = vmatmul.f32.gmra.mxu0 %v794
        %v840 = vpop.f32.mrf.mxu0
        %v841 = vadd.f32 0.0, %v840
        %842 = vdwg.mxu0
        %843 = vmatpush.msra.mxu0 %v562
        %844 = vmatpush.msra.mxu0 %v559
        %845 = vmatpush.msra.mxu0 %v556
        %846 = vmatpush.msra.mxu0 %v553
        %847 = vmatpush.msra.mxu0 %v550
        %848 = vmatpush.msra.mxu0 %v547
        %849 = vmatpush.msra.mxu0 %v544
        %850 = vmatpush.msra.mxu0 %v541
        %851 = vmatpush.msra.mxu0 %v538
        %852 = vmatpush.msra.mxu0 %v535
        %853 = vmatpush.msra.mxu0 %v532
        %854 = vmatpush.msra.mxu0 %v529
        %855 = vmatpush.msra.mxu0 %v526
        %856 = vmatpush.msra.mxu0 %v523
        %857 = vmatpush.msra.mxu0 %v520
        %858 = vmatpush.msra.mxu0 %v517
        %859 = vmatmul.f32.gmra.mxu0 %v794
        %v860 = vpop.f32.mrf.mxu0
        %v861 = vadd.f32 0.0, %v860
        %862 = vdwg.mxu0
        %v863 = vadd.f32 %v800, %v821
        %v864 = vsub.f32 0.0, %v863
        %v865 = vmul.f32 %v864, 1.442695
        %v866 = vpow.pop %v865
        %v867 = vadd.f32 %v866, 1.0
        %v868 = vrcp.pop %v867
        %v869 = vmul.f32 %v867, %v868
        %v870 = vsub.f32 1.0, %v869
        %v871 = vmul.f32 %v868, %v870
        %v872 = vadd.f32 %v868, %v871
        %vm873 = vweird.f32 %v867
        %vm874 = vweird.f32 %v868
        %vm875 = vmor %vm873, %vm874
        %v876 = vsel %vm875, %v868, %v872
        %v877 = vand.u32 2147483647, %v867
        %vm878 = vcmp.eq.f32.partialorder %v877, 8.507059e+37
        %v879 = vand.u32 %v867, 2147483648
        %v880 = vor.u32 1.1754944e-38, %v879
        %v881 = vsel %vm878, %v880, %v876
        %v882 = vmul.f32 1.0, %v881
        %v883 = vadd.f32 %v801, %v841
        %v884 = vsub.f32 0.0, %v883
        %v885 = vmul.f32 %v884, 1.442695
        %v886 = vpow.pop %v885
        %v887 = vadd.f32 %v886, 1.0
        %v888 = vrcp.pop %v887
        %v889 = vmul.f32 %v887, %v888
        %v890 = vsub.f32 1.0, %v889
        %v891 = vmul.f32 %v888, %v890
        %v892 = vadd.f32 %v888, %v891
        %vm893 = vweird.f32 %v887
        %vm894 = vweird.f32 %v888
        %vm895 = vmor %vm893, %vm894
        %v896 = vsel %vm895, %v888, %v892
        %v897 = vand.u32 2147483647, %v887
        %vm898 = vcmp.eq.f32.partialorder %v897, 8.507059e+37
        %v899 = vand.u32 %v887, 2147483648
        %v900 = vor.u32 1.1754944e-38, %v899
        %v901 = vsel %vm898, %v900, %v896
        %v902 = vmul.f32 1.0, %v901
        %v903 = vadd.f32 %v861, %v565
        %v904 = vmul.f32 %v882, %v903
        %v905 = vadd.f32 %v802, %v904
        %v906 = vtanh.pop %v905
        %v907 = vsub.f32 %v794, %v906
        %v908 = vmul.f32 %v902, %v907
        %v909 = vadd.f32 %v906, %v908
        %s910 = scalar_lea.vmem [#allocation4], 16
        %911 = vst [vmem:[%s910] sm:$0xff] %v909
        %s912 = smul.u32 3, 3
        %s913 = smul.addr %s912, 8
        %s914 = scalar_lea.vmem [#allocation3], %s913
        %v915 = vld [vmem:[%s914] sm:$0xff]
        %v916 = vld [vmem:[%s914 + $0x8] sm:$0xff]
        %v917 = vld [vmem:[%s914 + $0x10] sm:$0xff]
        %918 = vmatpush.msra.mxu0 %v560
        %919 = vmatpush.msra.mxu0 %v557
        %920 = vmatpush.msra.mxu0 %v554
        %921 = vmatpush.msra.mxu0 %v551
        %922 = vmatpush.msra.mxu0 %v548
        %923 = vmatpush.msra.mxu0 %v545
        %924 = vmatpush.msra.mxu0 %v542
        %925 = vmatpush.msra.mxu0 %v539
        %926 = vmatpush.msra.mxu0 %v536
        %927 = vmatpush.msra.mxu0 %v533
        %928 = vmatpush.msra.mxu0 %v530
        %929 = vmatpush.msra.mxu0 %v527
        %930 = vmatpush.msra.mxu0 %v524
        %931 = vmatpush.msra.mxu0 %v521
        %932 = vmatpush.msra.mxu0 %v518
        %933 = vmatpush.msra.mxu0 %v515
        %934 = vmatmul.f32.gmra.mxu0 %v909
        %v935 = vpop.f32.mrf.mxu0
        %v936 = vadd.f32 0.0, %v935
        %937 = vdwg.mxu0
        %938 = vmatpush.msra.mxu0 %v561
        %939 = vmatpush.msra.mxu0 %v558
        %940 = vmatpush.msra.mxu0 %v555
        %941 = vmatpush.msra.mxu0 %v552
        %942 = vmatpush.msra.mxu0 %v549
        %943 = vmatpush.msra.mxu0 %v546
        %944 = vmatpush.msra.mxu0 %v543
        %945 = vmatpush.msra.mxu0 %v540
        %946 = vmatpush.msra.mxu0 %v537
        %947 = vmatpush.msra.mxu0 %v534
        %948 = vmatpush.msra.mxu0 %v531
        %949 = vmatpush.msra.mxu0 %v528
        %950 = vmatpush.msra.mxu0 %v525
        %951 = vmatpush.msra.mxu0 %v522
        %952 = vmatpush.msra.mxu0 %v519
        %953 = vmatpush.msra.mxu0 %v516
        %954 = vmatmul.f32.gmra.mxu0 %v909
        %v955 = vpop.f32.mrf.mxu0
        %v956 = vadd.f32 0.0, %v955
        %957 = vdwg.mxu0
        %958 = vmatpush.msra.mxu0 %v562
        %959 = vmatpush.msra.mxu0 %v559
        %960 = vmatpush.msra.mxu0 %v556
        %961 = vmatpush.msra.mxu0 %v553
        %962 = vmatpush.msra.mxu0 %v550
        %963 = vmatpush.msra.mxu0 %v547
        %964 = vmatpush.msra.mxu0 %v544
        %965 = vmatpush.msra.mxu0 %v541
        %966 = vmatpush.msra.mxu0 %v538
        %967 = vmatpush.msra.mxu0 %v535
        %968 = vmatpush.msra.mxu0 %v532
        %969 = vmatpush.msra.mxu0 %v529
        %970 = vmatpush.msra.mxu0 %v526
        %971 = vmatpush.msra.mxu0 %v523
        %972 = vmatpush.msra.mxu0 %v520
        %973 = vmatpush.msra.mxu0 %v517
        %974 = vmatmul.f32.gmra.mxu0 %v909
        %v975 = vpop.f32.mrf.mxu0
        %v976 = vadd.f32 0.0, %v975
        %977 = vdwg.mxu0
        %v978 = vadd.f32 %v915, %v936
        %v979 = vsub.f32 0.0, %v978
        %v980 = vmul.f32 %v979, 1.442695
        %v981 = vpow.pop %v980
        %v982 = vadd.f32 %v981, 1.0
        %v983 = vrcp.pop %v982
        %v984 = vmul.f32 %v982, %v983
        %v985 = vsub.f32 1.0, %v984
        %v986 = vmul.f32 %v983, %v985
        %v987 = vadd.f32 %v983, %v986
        %vm988 = vweird.f32 %v982
        %vm989 = vweird.f32 %v983
        %vm990 = vmor %vm988, %vm989
        %v991 = vsel %vm990, %v983, %v987
        %v992 = vand.u32 2147483647, %v982
        %vm993 = vcmp.eq.f32.partialorder %v992, 8.507059e+37
        %v994 = vand.u32 %v982, 2147483648
        %v995 = vor.u32 1.1754944e-38, %v994
        %v996 = vsel %vm993, %v995, %v991
        %v997 = vmul.f32 1.0, %v996
        %v998 = vadd.f32 %v916, %v956
        %v999 = vsub.f32 0.0, %v998
        %v1000 = vmul.f32 %v999, 1.442695
        %v1001 = vpow.pop %v1000
        %v1002 = vadd.f32 %v1001, 1.0
        %v1003 = vrcp.pop %v1002
        %v1004 = vmul.f32 %v1002, %v1003
        %v1005 = vsub.f32 1.0, %v1004
        %v1006 = vmul.f32 %v1003, %v1005
        %v1007 = vadd.f32 %v1003, %v1006
        %vm1008 = vweird.f32 %v1002
        %vm1009 = vweird.f32 %v1003
        %vm1010 = vmor %vm1008, %vm1009
        %v1011 = vsel %vm1010, %v1003, %v1007
        %v1012 = vand.u32 2147483647, %v1002
        %vm1013 = vcmp.eq.f32.partialorder %v1012, 8.507059e+37
        %v1014 = vand.u32 %v1002, 2147483648
        %v1015 = vor.u32 1.1754944e-38, %v1014
        %v1016 = vsel %vm1013, %v1015, %v1011
        %v1017 = vmul.f32 1.0, %v1016
        %v1018 = vadd.f32 %v976, %v565
        %v1019 = vmul.f32 %v997, %v1018
        %v1020 = vadd.f32 %v917, %v1019
        %v1021 = vtanh.pop %v1020
        %v1022 = vsub.f32 %v909, %v1021
        %v1023 = vmul.f32 %v1017, %v1022
        %v1024 = vadd.f32 %v1021, %v1023
        %s1025 = scalar_lea.vmem [#allocation4], 24
        %1026 = vst [vmem:[%s1025] sm:$0xff] %v1024
        %1027 = vst [vmem:[#allocation2] sm:$0xff] %v1024
        %v1028 = vld [vmem:[#allocation4] sm:$0xff]
        %v1029 = vld [vmem:[#allocation4 + $0x8] sm:$0xff]
        %v1030 = vld [vmem:[#allocation4 + $0x10] sm:$0xff]
        %v1031 = vld [vmem:[#allocation4 + $0x18] sm:$0xff]
        %v1032 = vld [vmem:[#allocation11] sm:$0xff]
        %v1033 = vld [vmem:[#allocation11 + $0x8] sm:$0xff]
        %v1034 = vld [vmem:[#allocation11 + $0x10] sm:$0xff]
        %v1035 = vld [vmem:[#allocation11 + $0x18] sm:$0xff]
        %v1036 = vld [vmem:[#allocation11 + $0x20] sm:$0xff]
        %v1037 = vld [vmem:[#allocation11 + $0x28] sm:$0xff]
        %v1038 = vld [vmem:[#allocation11 + $0x30] sm:$0xff]
        %v1039 = vld [vmem:[#allocation11 + $0x38] sm:$0xff]
        %v1040 = vld [vmem:[#allocation11 + $0x40] sm:$0xff]
        %v1041 = vld [vmem:[#allocation11 + $0x48] sm:$0xff]
        %v1042 = vld [vmem:[#allocation11 + $0x50] sm:$0xff]
        %v1043 = vld [vmem:[#allocation11 + $0x58] sm:$0xff]
        %v1044 = vld [vmem:[#allocation11 + $0x60] sm:$0xff]
        %v1045 = vld [vmem:[#allocation11 + $0x68] sm:$0xff]
        %v1046 = vld [vmem:[#allocation11 + $0x70] sm:$0xff]
        %v1047 = vld [vmem:[#allocation11 + $0x78] sm:$0xff]
        %v1048 = vld [vmem:[%s6] sm:$0x1]
        %v1050 = vperm.slane %v1048, 0
        %1052 = vmatpush.msra.mxu0 %v1047
        %1053 = vmatpush.msra.mxu0 %v1046
        %1054 = vmatpush.msra.mxu0 %v1045
        %1055 = vmatpush.msra.mxu0 %v1044
        %1056 = vmatpush.msra.mxu0 %v1043
        %1057 = vmatpush.msra.mxu0 %v1042
        %1058 = vmatpush.msra.mxu0 %v1041
        %1059 = vmatpush.msra.mxu0 %v1040
        %1060 = vmatpush.msra.mxu0 %v1039
        %1061 = vmatpush.msra.mxu0 %v1038
        %1062 = vmatpush.msra.mxu0 %v1037
        %1063 = vmatpush.msra.mxu0 %v1036
        %1064 = vmatpush.msra.mxu0 %v1035
        %1065 = vmatpush.msra.mxu0 %v1034
        %1066 = vmatpush.msra.mxu0 %v1033
        %1067 = vmatpush.msra.mxu0 %v1032
        %1068 = vmatmul.f32.gmra.mxu0 %v1028
        %v1069 = vpop.f32.mrf.mxu0
        %v1070 = vadd.f32 %v1050, %v1069
        %1071 = vmatmul.f32.gmra.mxu0 %v1029
        %v1072 = vpop.f32.mrf.mxu0
        %v1073 = vadd.f32 %v1050, %v1072
        %1074 = vmatmul.f32.gmra.mxu0 %v1030
        %v1075 = vpop.f32.mrf.mxu0
        %v1076 = vadd.f32 %v1050, %v1075
        %1077 = vmatmul.f32.gmra.mxu0 %v1031
        %v1078 = vpop.f32.mrf.mxu0
        %v1079 = vadd.f32 %v1050, %v1078
        %1080 = vdwg.mxu0
        %1081 = vst [vmem:[%s348] sm:$0xff] %v1070
        %1082 = vst [vmem:[%s348 + $0x8] sm:$0xff] %v1073
        %1083 = vst [vmem:[%s348 + $0x10] sm:$0xff] %v1076
        %1084 = vst [vmem:[%s348 + $0x18] sm:$0xff] %v1079
        %s1085 = sand.u32 %s186, 1
        %s1086 = scalar_lea.sflag [#allocation7], %s1085
        %s1087 = sand.u32 %s186, 1
        %s1088 = smul.addr %s1087, 32
        %s1089 = scalar_lea.vmem [#allocation13], %s1088
        // Predicated region
        $region69: #{tpu_custom_call.1} parent=47 // pred_check
          %p1090 = pneg %p196
        $region70: #{tpu_custom_call.1} parent=47 // pred_check_branch
          %1092 = sbr.rel (%p1090) target = $region72
        $region71: #{tpu_custom_call.1} parent=47 // pred_region
          %s1093 = smul.u32 4, %s26
          %1095 = vsyncadd %s1086, 0
          %s1096 = smul.addr %s1093, 8
          %s1097 = scalar_lea.hbm %s7, %s1096
          %s1098 = sshll.u32 %s1089, 4
          %s1099 = int_to_ptr.vmem [resolvable:$true] %s1098
          %s1100 = sshll.u32 %s1097, 4
          %s1101 = int_to_ptr.hbm [resolvable:$true] %s1100
          %1106 = dma.vmem_to_hbm [thread:$0]  %s1099, 512, %s1101, %s1086, 128, 128, 8
        $region72: #{tpu_custom_call.1} parent=47 // pred_fallthru
          _
      $region48: #{tpu_custom_call.1} parent=5 // pred_fallthru
        _
      %p1107 = scmp.le.s32.totalorder 2, %s21
      // Predicated region
      $region73: #{tpu_custom_call.1} parent=5 // pred_check
        %p1108 = pneg %p1107
      $region74: #{tpu_custom_call.1} parent=5 // pred_check_branch
        %1110 = sbr.rel (%p1108) target = $region76
      $region75: #{tpu_custom_call.1} parent=5 // pred_region
        %s1111 = ssub.s32 %s21, 2
        // Predicated region
        $region77: #{tpu_custom_call.1} parent=75 // pred_check
          %p1112 = pneg %p202
        $region78: #{tpu_custom_call.1} parent=75 // pred_check_branch
          %1114 = sbr.rel (%p1112) target = $region80
        $region79: #{tpu_custom_call.1} parent=75 // pred_region
          %s1115 = sand.u32 %s187, 1
          %s1116 = scalar_lea.sflag [#allocation7], %s1115
          %s1117 = sand.u32 %s187, 1
          %s1118 = smul.addr %s1117, 32
          %s1119 = scalar_lea.vmem [#allocation13], %s1118
          %1121 = dma.done %s1116, 512
        $region80: #{tpu_custom_call.1} parent=75 // pred_fallthru
          _
      $region76: #{tpu_custom_call.1} parent=5 // pred_fallthru
        _
    $region6: #{tpu_custom_call.1} parent=1 // loop_footer
      %s25 = sadd.s32 1, %s21
    $region7: #{tpu_custom_call.1} parent=1 // loop_footer_branch
      %20 = sbr.rel target = $region3
    $region8: #{tpu_custom_call.1} parent=1 // loop_exit
      _
    %1122 = vsyncpa [#allocation6], 1
    %s1123 = scalar_lea.sflag [#allocation6], 1
    %1124 = vsyncpa %s1123, 1
    %1125 = vsyncpa [#allocation9], 1
    %1126 = vsyncpa [#allocation12], 1
    %1127 = vsyncpa [#allocation7], 1
    %s1128 = scalar_lea.sflag [#allocation7], 1
    %1129 = vsyncpa %s1128, 1

</llo_original>
